<compile_context>
chip_gen: v7x
topology: tpu7x:2x2x1
jax: 0.10.0
libtpu: 0.0.40
codegen_flags: <defaults>
</compile_context>

<pallas_src>
import functools

import jax
import jax.numpy as jnp
from jax.experimental import pallas as pl
from jax.experimental.pallas import tpu as pltpu

LN_EPS = 1e-12  # HF BERT layer_norm_eps


# ------------------------------ small helpers -------------------------------

def _full_spec(shape):
    """Full-array block (same block for every grid step). Grid rank is 1."""
    nd = len(shape)
    return pl.BlockSpec(shape, lambda l, _nd=nd: (0,) * _nd)


def _layer_spec(shape):
    """Per-layer block: array is [L, *shape]; grid index l selects the layer."""
    nd = len(shape)
    return pl.BlockSpec((None,) + tuple(shape), lambda l, _nd=nd: (l,) + (0,) * _nd)


def _ln(h, g, b):
    """LayerNorm over the last axis (f32 math). g, b are [1, H]."""
    mu = jnp.mean(h, axis=-1, keepdims=True)
    d = h - mu
    var = jnp.mean(d * d, axis=-1, keepdims=True)
    return d * jax.lax.rsqrt(var + LN_EPS) * g.astype(jnp.float32) + b.astype(jnp.float32)


def _gelu_tanh(y):
    return 0.5 * y * (1.0 + jnp.tanh(0.7978845608028654 * (y + 0.044715 * y * y * y)))


# ------------------------------ Pallas kernels ------------------------------

def _bert_stack_kernel(x_ref, mask_ref, embg_ref, embb_ref,
                       wqkv_ref, bqkv_ref, wo_ref, bo_ref,
                       ln1g_ref, ln1b_ref, w1_ref, b1_ref, w2_ref, b2_ref,
                       ln2g_ref, ln2b_ref, o_ref, *, B, S, nH, dh):
    """One grid step = one full BERT encoder layer; o_ref carries activations."""
    H = nH * dh
    l = pl.program_id(0)

    # Grid step 0: apply the embedding LayerNorm and seed the carried activation.
    @pl.when(l == 0)
    def _():
        o_ref[...] = _ln(x_ref[...].astype(jnp.float32),
                         embg_ref[...], embb_ref[...]).astype(o_ref.dtype)

    x = o_ref[...].astype(jnp.float32)                                   # [T, H], T = B*S

    # ---- fused Q/K/V projection: one matmul with lane width 3H ----
    qkv = (jnp.dot(x, wqkv_ref[...].astype(jnp.float32),
                   preferred_element_type=jnp.float32)
           + bqkv_ref[...].astype(jnp.float32))
    q = qkv[:, :H]
    k = qkv[:, H:2 * H]
    v = qkv[:, 2 * H:]

    # ---- multi-head self-attention (all heads in this invocation) ----
    mask = mask_ref[...].astype(jnp.float32)[:, None, :]                 # [B, 1, S] additive
    scale = 1.0 / (dh ** 0.5)
    ctx_heads = []
    for h in range(nH):                                                  # static unroll
        qh = q[:, h * dh:(h + 1) * dh].reshape(B, S, dh)
        kh = k[:, h * dh:(h + 1) * dh].reshape(B, S, dh)
        vh = v[:, h * dh:(h + 1) * dh].reshape(B, S, dh)
        s = jnp.einsum('bqd,bkd->bqk', qh, kh,
                       preferred_element_type=jnp.float32) * scale       # [B, S, S]
        s = s + mask
        s = s - jnp.max(s, axis=-1, keepdims=True)
        p = jnp.exp(s)
        p = p * pl.reciprocal(jnp.sum(p, axis=-1, keepdims=True), approx=True)
        ch = jnp.einsum('bqk,bkd->bqd', p, vh,
                        preferred_element_type=jnp.float32)              # [B, S, dh]
        ctx_heads.append(ch.reshape(B * S, dh))
    ctx = jnp.concatenate(ctx_heads, axis=-1)                            # [T, H]

    # ---- attention output projection + add & LayerNorm ----
    attn = (jnp.dot(ctx, wo_ref[...].astype(jnp.float32),
                    preferred_element_type=jnp.float32)
            + bo_ref[...].astype(jnp.float32))
    h1 = _ln(attn + x, ln1g_ref[...], ln1b_ref[...])

    # ---- FFN: GELU(h1 @ W1 + b1) @ W2 + b2, add & LayerNorm ----
    f = (jnp.dot(h1, w1_ref[...].astype(jnp.float32),
                 preferred_element_type=jnp.float32)
         + b1_ref[...].astype(jnp.float32))
    f = _gelu_tanh(f)
    f = (jnp.dot(f, w2_ref[...].astype(jnp.float32),
                 preferred_element_type=jnp.float32)
         + b2_ref[...].astype(jnp.float32))
    out = _ln(f + h1, ln2g_ref[...], ln2b_ref[...])

    o_ref[...] = out.astype(o_ref.dtype)


def encoder_stack(x, mask_add, enc, *, B, S, nH, dh, L, I):
    T, H = x.shape

    # Advisory cost for XLA scheduling around the custom call (whole stack).
    per_layer_flops = 2 * T * (H * 3 * H + H * H + H * I + I * H) + 4 * B * nH * S * S * dh
    flops = L * per_layer_flops
    transcendentals = L * (B * nH * S * S + T * I)                # softmax exp + GELU tanh
    bytes_accessed = 4 * (2 * T * H + B * S + 2 * H
                          + L * (3 * H * H + H * H + 2 * H * I + 3 * H + I + 6 * H))
    cost = pl.CostEstimate(flops=int(flops),
                           transcendentals=int(transcendentals),
                           bytes_accessed=int(bytes_accessed))

    kernel = functools.partial(_bert_stack_kernel, B=B, S=S, nH=nH, dh=dh)
    return pl.pallas_call(
        kernel,
        out_shape=jax.ShapeDtypeStruct((T, H), x.dtype),
        grid=(L,),
        in_specs=[
            _full_spec((T, H)),        # embeddings (read at layer 0 only)
            _full_spec((B, S)),        # additive attention mask
            _full_spec((1, H)),        # embedding LN gamma
            _full_spec((1, H)),        # embedding LN beta
            _layer_spec((H, 3 * H)),   # fused QKV weight
            _layer_spec((1, 3 * H)),   # fused QKV bias
            _layer_spec((H, H)),       # attention output weight
            _layer_spec((1, H)),       # attention output bias
            _layer_spec((1, H)),       # ln1 gamma
            _layer_spec((1, H)),       # ln1 beta
            _layer_spec((H, I)),       # fc1 weight
            _layer_spec((1, I)),       # fc1 bias
            _layer_spec((I, H)),       # fc2 weight
            _layer_spec((1, H)),       # fc2 bias
            _layer_spec((1, H)),       # ln2 gamma
            _layer_spec((1, H)),       # ln2 beta
        ],
        out_specs=_full_spec((T, H)),  # same block every step -> VMEM-resident carry
        compiler_params=pltpu.CompilerParams(dimension_semantics=("arbitrary",)),
        cost_estimate=cost,
    )(x, mask_add, enc["emb_ln_g"], enc["emb_ln_b"],
      enc["wqkv"], enc["bqkv"], enc["wo"], enc["bo"],
      enc["ln1g"], enc["ln1b"], enc["w1"], enc["b1"],
      enc["w2"], enc["b2"], enc["ln2g"], enc["ln2b"])


def _head_kernel(cls_ref, wp_ref, bp_ref, wc_ref, bc_ref, o_ref):
    c = cls_ref[...].astype(jnp.float32)
    pooled = jnp.tanh(jnp.dot(c, wp_ref[...].astype(jnp.float32),
                              preferred_element_type=jnp.float32)
                      + bp_ref[...].astype(jnp.float32))
    # classifier dropout is identity in eval
    logits = jnp.dot(pooled, wc_ref[...].astype(jnp.float32),
                     preferred_element_type=jnp.float32) + bc_ref[...].astype(jnp.float32)
    o_ref[...] = logits.astype(o_ref.dtype)


def pooler_classifier(cls_tok, wp, bp, wc, bc):
    B, H = cls_tok.shape
    C = wc.shape[1]
    return pl.pallas_call(
        _head_kernel,
        out_shape=jax.ShapeDtypeStruct((B, C), cls_tok.dtype),
        grid=(1,),
        in_specs=[_full_spec((B, H)), _full_spec((H, H)), _full_spec((1, H)),
                  _full_spec((H, C)), _full_spec((1, C))],
        out_specs=_full_spec((B, C)),
    )(cls_tok, wp, bp.reshape(1, H), wc, bc.reshape(1, C))


# --------------------------- model config / params --------------------------

class Cfg:
    vocab_size = 100
    max_position = 32
    type_vocab = 2
    hidden = 32
    heads = 2
    intermediate = 64
    layers = 2
    n_class = 3


def _dense(key, fan_in, fan_out, std=0.02):
    return {
        "w": jax.random.normal(key, (fan_in, fan_out), jnp.float32) * std,
        "b": jnp.zeros((fan_out,), jnp.float32),
    }


def init_params(key, cfg):
    std = 0.02
    ks = list(jax.random.split(key, 8 + 8 * cfg.layers))
    it = iter(ks)
    H, I = cfg.hidden, cfg.intermediate
    params = {
        "word_emb": jax.random.normal(next(it), (cfg.vocab_size, H), jnp.float32) * std,
        "pos_emb": jax.random.normal(next(it), (cfg.max_position, H), jnp.float32) * std,
        "type_emb": jax.random.normal(next(it), (cfg.type_vocab, H), jnp.float32) * std,
        "emb_ln_g": jnp.ones((H,), jnp.float32),
        "emb_ln_b": jnp.zeros((H,), jnp.float32),
        "pooler": _dense(next(it), H, H),
        "cls": _dense(next(it), H, cfg.n_class),
        "layers": [],
    }
    for _ in range(cfg.layers):
        layer = {
            "q": _dense(next(it), H, H),
            "k": _dense(next(it), H, H),
            "v": _dense(next(it), H, H),
            "o": _dense(next(it), H, H),
            "fc1": _dense(next(it), H, I),
            "fc2": _dense(next(it), I, H),
            "ln1_g": jnp.ones((H,), jnp.float32),
            "ln1_b": jnp.zeros((H,), jnp.float32),
            "ln2_g": jnp.ones((H,), jnp.float32),
            "ln2_b": jnp.zeros((H,), jnp.float32),
        }
        params["layers"].append(layer)
    return params


def pack_encoder_params(params, cfg):
    """Stack per-layer weights along a leading layer axis (done once, outside jit)."""
    H, I = cfg.hidden, cfg.intermediate
    ls = params["layers"]
    stack = lambda f: jnp.stack([f(l) for l in ls])
    return {
        "emb_ln_g": params["emb_ln_g"].reshape(1, H),
        "emb_ln_b": params["emb_ln_b"].reshape(1, H),
        "wqkv": stack(lambda l: jnp.concatenate(
            [l["q"]["w"], l["k"]["w"], l["v"]["w"]], axis=1)),                   # [L, H, 3H]
        "bqkv": stack(lambda l: jnp.concatenate(
            [l["q"]["b"], l["k"]["b"], l["v"]["b"]]).reshape(1, 3 * H)),         # [L, 1, 3H]
        "wo": stack(lambda l: l["o"]["w"]),                                      # [L, H, H]
        "bo": stack(lambda l: l["o"]["b"].reshape(1, H)),                        # [L, 1, H]
        "ln1g": stack(lambda l: l["ln1_g"].reshape(1, H)),
        "ln1b": stack(lambda l: l["ln1_b"].reshape(1, H)),
        "w1": stack(lambda l: l["fc1"]["w"]),                                    # [L, H, I]
        "b1": stack(lambda l: l["fc1"]["b"].reshape(1, I)),                      # [L, 1, I]
        "w2": stack(lambda l: l["fc2"]["w"]),                                    # [L, I, H]
        "b2": stack(lambda l: l["fc2"]["b"].reshape(1, H)),                      # [L, 1, H]
        "ln2g": stack(lambda l: l["ln2_g"].reshape(1, H)),
        "ln2b": stack(lambda l: l["ln2_b"].reshape(1, H)),
    }


# ------------------------------- forward pass --------------------------------

def bert_forward(params, enc, input_ids, token_type_ids, attention_mask, cfg):
    B, S = input_ids.shape
    H, nH = cfg.hidden, cfg.heads
    dh = H // nH

    # Embeddings (gather = plain-JAX glue). Embedding LN is fused into the stack kernel.
    pos_ids = jnp.arange(S)
    emb = (params["word_emb"][input_ids]
           + params["pos_emb"][pos_ids][None, :, :]
           + params["type_emb"][token_type_ids])
    x = emb.reshape(B * S, H).astype(jnp.float32)

    # Additive attention mask [B, S]: 0 for keep, -1e9 for padding.
    mask_add = (1.0 - attention_mask.astype(jnp.float32)) * (-1e9)

    # Whole encoder stack in one pallas_call (grid over layers).
    x = encoder_stack(x, mask_add, enc, B=B, S=S, nH=nH, dh=dh,
                      L=cfg.layers, I=cfg.intermediate)

    # Pooler (tanh on [CLS]) + classifier, fused into one small kernel.
    cls_tok = x.reshape(B, S, H)[:, 0, :]
    logits = pooler_classifier(cls_tok, params["pooler"]["w"], params["pooler"]["b"],
                               params["cls"]["w"], params["cls"]["b"])
    return logits  # [B, n_class]


# ----------------------------------- main ------------------------------------

if __name__ == "__main__":
    cfg = Cfg()
    key = jax.random.PRNGKey(0)
    k_param, k_ids = jax.random.split(key)

    B, S = 2, 8
    params = init_params(k_param, cfg)
    enc = pack_encoder_params(params, cfg)   # pack once, outside the jitted forward

    input_ids = jax.random.randint(k_ids, (B, S), 0, cfg.vocab_size, dtype=jnp.int32)
    token_type_ids = jnp.zeros((B, S), jnp.int32)
    attention_mask = jnp.ones((B, S), jnp.int32)

    fwd = jax.jit(lambda p, e, i, t, a: bert_forward(p, e, i, t, a, cfg))
    logits = fwd(params, enc, input_ids, token_type_ids, attention_mask)
    logits = jax.block_until_ready(logits)
    assert logits.shape == (B, cfg.n_class)
    print("KERNEL_OK")
</pallas_src>

<mosaic_0001>
module attributes {stable_mosaic.version = 11 : i64} {
  func.func @_head_kernel(%arg0: i32, %arg1: memref<2x32xf32, #tpu.memory_space<vmem>>, %arg2: memref<32x32xf32, #tpu.memory_space<vmem>>, %arg3: memref<1x32xf32, #tpu.memory_space<vmem>>, %arg4: memref<32x3xf32, #tpu.memory_space<vmem>>, %arg5: memref<1x3xf32, #tpu.memory_space<vmem>>, %arg6: memref<2x3xf32, #tpu.memory_space<vmem>>) attributes {dimension_semantics = [#tpu.dimension_semantics<arbitrary>], iteration_bounds = array<i64: 1>, scalar_prefetch = 0 : i64, scratch_operands = 0 : i64, tpu.core_type = #tpu.core_type<tc>, window_params = [{pipeline_mode = #tpu.pipeline_mode<synchronous>, transform_indices = @transform_0, window_bounds = array<i64: 2, 32>}, {pipeline_mode = #tpu.pipeline_mode<synchronous>, transform_indices = @transform_1, window_bounds = array<i64: 32, 32>}, {pipeline_mode = #tpu.pipeline_mode<synchronous>, transform_indices = @transform_2, window_bounds = array<i64: 1, 32>}, {pipeline_mode = #tpu.pipeline_mode<synchronous>, transform_indices = @transform_3, window_bounds = array<i64: 32, 3>}, {pipeline_mode = #tpu.pipeline_mode<synchronous>, transform_indices = @transform_4, window_bounds = array<i64: 1, 3>}, {pipeline_mode = #tpu.pipeline_mode<synchronous>, transform_indices = @transform_5, window_bounds = array<i64: 2, 3>}]} {
    %c0 = arith.constant 0 : index
    %c0_0 = arith.constant 0 : index
    %0 = vector.load %arg1[%c0, %c0_0] : memref<2x32xf32, #tpu.memory_space<vmem>>, vector<2x32xf32>
    %c0_1 = arith.constant 0 : index
    %c0_2 = arith.constant 0 : index
    %1 = vector.load %arg2[%c0_1, %c0_2] : memref<32x32xf32, #tpu.memory_space<vmem>>, vector<32x32xf32>
    %cst = arith.constant dense<0.000000e+00> : vector<2x32xf32>
    %2 = tpu.matmul %0, %1, %cst {dimension_numbers = #tpu.dot_dimension_numbers<[1], [0], [0], [1], [0, 0, 1, 1], [], []>} : vector<2x32xf32>, vector<32x32xf32>, vector<2x32xf32> -> vector<2x32xf32>
    %c0_3 = arith.constant 0 : index
    %c0_4 = arith.constant 0 : index
    %3 = vector.load %arg3[%c0_3, %c0_4] : memref<1x32xf32, #tpu.memory_space<vmem>>, vector<1x32xf32>
    %4 = vector.broadcast %3 : vector<1x32xf32> to vector<2x32xf32>
    %5 = arith.addf %2, %4 : vector<2x32xf32>
    %6 = math.tanh %5 : vector<2x32xf32>
    %c0_5 = arith.constant 0 : index
    %c0_6 = arith.constant 0 : index
    %7 = vector.load %arg4[%c0_5, %c0_6] : memref<32x3xf32, #tpu.memory_space<vmem>>, vector<32x3xf32>
    %cst_7 = arith.constant dense<0.000000e+00> : vector<2x3xf32>
    %8 = tpu.matmul %6, %7, %cst_7 {dimension_numbers = #tpu.dot_dimension_numbers<[1], [0], [0], [1], [0, 0, 1, 1], [], []>} : vector<2x32xf32>, vector<32x3xf32>, vector<2x3xf32> -> vector<2x3xf32>
    %c0_8 = arith.constant 0 : index
    %c0_9 = arith.constant 0 : index
    %9 = vector.load %arg5[%c0_8, %c0_9] : memref<1x3xf32, #tpu.memory_space<vmem>>, vector<1x3xf32>
    %10 = vector.broadcast %9 : vector<1x3xf32> to vector<2x3xf32>
    %11 = arith.addf %8, %10 : vector<2x3xf32>
    %c0_10 = arith.constant 0 : index
    %c0_11 = arith.constant 0 : index
    %12 = vector.load %arg6[%c0_10, %c0_11] : memref<2x3xf32, #tpu.memory_space<vmem>>, vector<2x3xf32>
    tpu.vector_store %arg6[%c0_10, %c0_11], %11 {strides = array<i32>} : memref<2x3xf32, #tpu.memory_space<vmem>>, vector<2x3xf32>,
    return
  }
  func.func @transform_0(%arg0: i32) -> (i32, i32) {
    %c0_i32 = arith.constant 0 : i32
    %c0_i32_0 = arith.constant 0 : i32
    %c0_i32_1 = arith.constant 0 : i32
    return %c0_i32, %c0_i32_0 : i32, i32
  }
  func.func @transform_1(%arg0: i32) -> (i32, i32) {
    %c0_i32 = arith.constant 0 : i32
    %c0_i32_0 = arith.constant 0 : i32
    %c0_i32_1 = arith.constant 0 : i32
    return %c0_i32, %c0_i32_0 : i32, i32
  }
  func.func @transform_2(%arg0: i32) -> (i32, i32) {
    %c0_i32 = arith.constant 0 : i32
    %c0_i32_0 = arith.constant 0 : i32
    %c0_i32_1 = arith.constant 0 : i32
    return %c0_i32, %c0_i32_0 : i32, i32
  }
  func.func @transform_3(%arg0: i32) -> (i32, i32) {
    %c0_i32 = arith.constant 0 : i32
    %c0_i32_0 = arith.constant 0 : i32
    %c0_i32_1 = arith.constant 0 : i32
    return %c0_i32, %c0_i32_0 : i32, i32
  }
  func.func @transform_4(%arg0: i32) -> (i32, i32) {
    %c0_i32 = arith.constant 0 : i32
    %c0_i32_0 = arith.constant 0 : i32
    %c0_i32_1 = arith.constant 0 : i32
    return %c0_i32, %c0_i32_0 : i32, i32
  }
  func.func @transform_5(%arg0: i32) -> (i32, i32) {
    %c0_i32 = arith.constant 0 : i32
    %c0_i32_0 = arith.constant 0 : i32
    %c0_i32_1 = arith.constant 0 : i32
    return %c0_i32, %c0_i32_0 : i32, i32
  }
}

module attributes {stable_mosaic.version = 11 : i64} {
  func.func @_bert_stack_kernel(%arg0: i32, %arg1: memref<16x32xf32, #tpu.memory_space<vmem>>, %arg2: memref<2x8xf32, #tpu.memory_space<vmem>>, %arg3: memref<1x32xf32, #tpu.memory_space<vmem>>, %arg4: memref<1x32xf32, #tpu.memory_space<vmem>>, %arg5: memref<1x32x96xf32, #tpu.memory_space<vmem>>, %arg6: memref<1x1x96xf32, #tpu.memory_space<vmem>>, %arg7: memref<1x32x32xf32, #tpu.memory_space<vmem>>, %arg8: memref<1x1x32xf32, #tpu.memory_space<vmem>>, %arg9: memref<1x1x32xf32, #tpu.memory_space<vmem>>, %arg10: memref<1x1x32xf32, #tpu.memory_space<vmem>>, %arg11: memref<1x32x64xf32, #tpu.memory_space<vmem>>, %arg12: memref<1x1x64xf32, #tpu.memory_space<vmem>>, %arg13: memref<1x64x32xf32, #tpu.memory_space<vmem>>, %arg14: memref<1x1x32xf32, #tpu.memory_space<vmem>>, %arg15: memref<1x1x32xf32, #tpu.memory_space<vmem>>, %arg16: memref<1x1x32xf32, #tpu.memory_space<vmem>>, %arg17: memref<16x32xf32, #tpu.memory_space<vmem>>) attributes {dimension_semantics = [#tpu.dimension_semantics<arbitrary>], iteration_bounds = array<i64: 2>, scalar_prefetch = 0 : i64, scratch_operands = 0 : i64, tpu.core_type = #tpu.core_type<tc>, window_params = [{pipeline_mode = #tpu.pipeline_mode<synchronous>, transform_indices = @transform_0, window_bounds = array<i64: 16, 32>}, {pipeline_mode = #tpu.pipeline_mode<synchronous>, transform_indices = @transform_1, window_bounds = array<i64: 2, 8>}, {pipeline_mode = #tpu.pipeline_mode<synchronous>, transform_indices = @transform_2, window_bounds = array<i64: 1, 32>}, {pipeline_mode = #tpu.pipeline_mode<synchronous>, transform_indices = @transform_3, window_bounds = array<i64: 1, 32>}, {transform_indices = @transform_4, window_bounds = array<i64: 1, 32, 96>}, {transform_indices = @transform_5, window_bounds = array<i64: 1, 1, 96>}, {transform_indices = @transform_6, window_bounds = array<i64: 1, 32, 32>}, {transform_indices = @transform_7, window_bounds = array<i64: 1, 1, 32>}, {transform_indices = @transform_8, window_bounds = array<i64: 1, 1, 32>}, {transform_indices = @transform_9, window_bounds = array<i64: 1, 1, 32>}, {transform_indices = @transform_10, window_bounds = array<i64: 1, 32, 64>}, {transform_indices = @transform_11, window_bounds = array<i64: 1, 1, 64>}, {transform_indices = @transform_12, window_bounds = array<i64: 1, 64, 32>}, {transform_indices = @transform_13, window_bounds = array<i64: 1, 1, 32>}, {transform_indices = @transform_14, window_bounds = array<i64: 1, 1, 32>}, {transform_indices = @transform_15, window_bounds = array<i64: 1, 1, 32>}, {pipeline_mode = #tpu.pipeline_mode<synchronous>, transform_indices = @transform_16, window_bounds = array<i64: 16, 32>}]} {
    %c0_i32 = arith.constant 0 : i32
    %0 = arith.cmpi eq, %arg0, %c0_i32 : i32
    %1 = arith.extui %0 : i1 to i32
    %c0_i32_0 = arith.constant 0 : i32
    %2 = arith.cmpi ne, %1, %c0_i32_0 : i32
    scf.if %2 {
      %c0_69 = arith.constant 0 : index
      %c0_70 = arith.constant 0 : index
      %148 = vector.load %arg1[%c0_69, %c0_70] : memref<16x32xf32, #tpu.memory_space<vmem>>, vector<16x32xf32>
      %c0_71 = arith.constant 0 : index
      %c0_72 = arith.constant 0 : index
      %149 = vector.load %arg3[%c0_71, %c0_72] : memref<1x32xf32, #tpu.memory_space<vmem>>, vector<1x32xf32>
      %c0_73 = arith.constant 0 : index
      %c0_74 = arith.constant 0 : index
      %150 = vector.load %arg4[%c0_73, %c0_74] : memref<1x32xf32, #tpu.memory_space<vmem>>, vector<1x32xf32>
      %cst_75 = arith.constant dense<0.000000e+00> : vector<16xf32>
      %151 = vector.multi_reduction <add>, %148, %cst_75 [1] : vector<16x32xf32> to vector<16xf32>
      %152 = vector.shape_cast %151 : vector<16xf32> to vector<16x1xf32>
      %cst_76 = arith.constant 3.200000e+01 : f32
      %153 = vector.broadcast %cst_76 : f32 to vector<16x1xf32>
      %154 = arith.divf %152, %153 : vector<16x1xf32>
      %155 = vector.broadcast %154 : vector<16x1xf32> to vector<16x32xf32>
      %156 = arith.subf %148, %155 : vector<16x32xf32>
      %157 = arith.mulf %156, %156 : vector<16x32xf32>
      %cst_77 = arith.constant dense<0.000000e+00> : vector<16xf32>
      %158 = vector.multi_reduction <add>, %157, %cst_77 [1] : vector<16x32xf32> to vector<16xf32>
      %159 = vector.shape_cast %158 : vector<16xf32> to vector<16x1xf32>
      %cst_78 = arith.constant 3.200000e+01 : f32
      %160 = vector.broadcast %cst_78 : f32 to vector<16x1xf32>
      %161 = arith.divf %159, %160 : vector<16x1xf32>
      %cst_79 = arith.constant 9.99999996E-13 : f32
      %162 = vector.broadcast %cst_79 : f32 to vector<16x1xf32>
      %163 = arith.addf %161, %162 : vector<16x1xf32>
      %164 = math.rsqrt %163 : vector<16x1xf32>
      %165 = vector.broadcast %164 : vector<16x1xf32> to vector<16x32xf32>
      %166 = arith.mulf %156, %165 : vector<16x32xf32>
      %167 = vector.broadcast %149 : vector<1x32xf32> to vector<16x32xf32>
      %168 = arith.mulf %166, %167 : vector<16x32xf32>
      %169 = vector.broadcast %150 : vector<1x32xf32> to vector<16x32xf32>
      %170 = arith.addf %168, %169 : vector<16x32xf32>
      %c0_80 = arith.constant 0 : index
      %c0_81 = arith.constant 0 : index
      %171 = vector.load %arg17[%c0_80, %c0_81] : memref<16x32xf32, #tpu.memory_space<vmem>>, vector<16x32xf32>
      tpu.vector_store %arg17[%c0_80, %c0_81], %170 {strides = array<i32>} : memref<16x32xf32, #tpu.memory_space<vmem>>, vector<16x32xf32>,
    } else {
    }
    %c0 = arith.constant 0 : index
    %c0_1 = arith.constant 0 : index
    %3 = vector.load %arg17[%c0, %c0_1] : memref<16x32xf32, #tpu.memory_space<vmem>>, vector<16x32xf32>
    %c0_2 = arith.constant 0 : index
    %c0_3 = arith.constant 0 : index
    %c0_4 = arith.constant 0 : index
    %4 = vector.load %arg5[%c0_2, %c0_3, %c0_4] : memref<1x32x96xf32, #tpu.memory_space<vmem>>, vector<1x32x96xf32>
    %5 = vector.shape_cast %4 : vector<1x32x96xf32> to vector<32x96xf32>
    %cst = arith.constant dense<0.000000e+00> : vector<16x96xf32>
    %6 = tpu.matmul %3, %5, %cst {dimension_numbers = #tpu.dot_dimension_numbers<[1], [0], [0], [1], [0, 0, 1, 1], [], []>} : vector<16x32xf32>, vector<32x96xf32>, vector<16x96xf32> -> vector<16x96xf32>
    %c0_5 = arith.constant 0 : index
    %c0_6 = arith.constant 0 : index
    %c0_7 = arith.constant 0 : index
    %7 = vector.load %arg6[%c0_5, %c0_6, %c0_7] : memref<1x1x96xf32, #tpu.memory_space<vmem>>, vector<1x1x96xf32>
    %8 = vector.shape_cast %7 : vector<1x1x96xf32> to vector<1x96xf32>
    %9 = vector.broadcast %8 : vector<1x96xf32> to vector<16x96xf32>
    %10 = arith.addf %6, %9 : vector<16x96xf32>
    %11 = vector.extract_strided_slice %10 {offsets = [0, 0], sizes = [16, 32], strides = [1, 1]} : vector<16x96xf32> to vector<16x32xf32>
    %12 = vector.extract_strided_slice %10 {offsets = [0, 32], sizes = [16, 32], strides = [1, 1]} : vector<16x96xf32> to vector<16x32xf32>
    %13 = vector.extract_strided_slice %10 {offsets = [0, 64], sizes = [16, 32], strides = [1, 1]} : vector<16x96xf32> to vector<16x32xf32>
    %c0_8 = arith.constant 0 : index
    %c0_9 = arith.constant 0 : index
    %14 = vector.load %arg2[%c0_8, %c0_9] : memref<2x8xf32, #tpu.memory_space<vmem>>, vector<2x8xf32>
    %15 = vector.shape_cast %14 : vector<2x8xf32> to vector<2x1x8xf32>
    %16 = vector.extract_strided_slice %11 {offsets = [0, 0], sizes = [16, 16], strides = [1, 1]} : vector<16x32xf32> to vector<16x16xf32>
    %17 = vector.shape_cast %16 : vector<16x16xf32> to vector<2x8x16xf32>
    %18 = vector.extract_strided_slice %12 {offsets = [0, 0], sizes = [16, 16], strides = [1, 1]} : vector<16x32xf32> to vector<16x16xf32>
    %19 = vector.shape_cast %18 : vector<16x16xf32> to vector<2x8x16xf32>
    %20 = vector.extract_strided_slice %13 {offsets = [0, 0], sizes = [16, 16], strides = [1, 1]} : vector<16x32xf32> to vector<16x16xf32>
    %21 = vector.shape_cast %20 : vector<16x16xf32> to vector<2x8x16xf32>
    "tpu.trace_start"() <{level = 10 : i32, message = "bqd,bkd->bqk"}> : () -> ()
    %cst_10 = arith.constant dense<0.000000e+00> : vector<2x8x8xf32>
    %22 = tpu.matmul %17, %19, %cst_10 {dimension_numbers = #tpu.dot_dimension_numbers<[2], [2], [1], [1], [0, 0, 0, 1, 1, 1], [0], [0]>} : vector<2x8x16xf32>, vector<2x8x16xf32>, vector<2x8x8xf32> -> vector<2x8x8xf32>
    "tpu.trace_stop"() : () -> ()
    %cst_11 = arith.constant 2.500000e-01 : f32
    %23 = vector.broadcast %cst_11 : f32 to vector<2x8x8xf32>
    %24 = arith.mulf %22, %23 : vector<2x8x8xf32>
    %25 = vector.broadcast %15 : vector<2x1x8xf32> to vector<2x8x8xf32>
    %26 = arith.addf %24, %25 : vector<2x8x8xf32>
    %cst_12 = arith.constant dense<0xFF800000> : vector<2x8xf32>
    %27 = vector.multi_reduction <maximumf>, %26, %cst_12 [2] : vector<2x8x8xf32> to vector<2x8xf32>
    %28 = vector.shape_cast %27 : vector<2x8xf32> to vector<2x8x1xf32>
    %29 = vector.broadcast %28 : vector<2x8x1xf32> to vector<2x8x8xf32>
    %30 = arith.subf %26, %29 : vector<2x8x8xf32>
    %31 = math.exp %30 : vector<2x8x8xf32>
    %cst_13 = arith.constant dense<0.000000e+00> : vector<2x8xf32>
    %32 = vector.multi_reduction <add>, %31, %cst_13 [2] : vector<2x8x8xf32> to vector<2x8xf32>
    %33 = vector.shape_cast %32 : vector<2x8xf32> to vector<2x8x1xf32>
    %34 = tpu.reciprocal %33 {approx = true} : vector<2x8x1xf32> -> vector<2x8x1xf32>
    %35 = vector.broadcast %34 : vector<2x8x1xf32> to vector<2x8x8xf32>
    %36 = arith.mulf %31, %35 : vector<2x8x8xf32>
    "tpu.trace_start"() <{level = 10 : i32, message = "bqk,bkd->bqd"}> : () -> ()
    %cst_14 = arith.constant dense<0.000000e+00> : vector<2x8x16xf32>
    %37 = tpu.matmul %36, %21, %cst_14 {dimension_numbers = #tpu.dot_dimension_numbers<[2], [1], [1], [2], [0, 0, 0, 1, 1, 2], [0], [0]>} : vector<2x8x8xf32>, vector<2x8x16xf32>, vector<2x8x16xf32> -> vector<2x8x16xf32>
    "tpu.trace_stop"() : () -> ()
    %38 = vector.shape_cast %37 : vector<2x8x16xf32> to vector<16x16xf32>
    %39 = vector.extract_strided_slice %11 {offsets = [0, 16], sizes = [16, 16], strides = [1, 1]} : vector<16x32xf32> to vector<16x16xf32>
    %40 = vector.shape_cast %39 : vector<16x16xf32> to vector<2x8x16xf32>
    %41 = vector.extract_strided_slice %12 {offsets = [0, 16], sizes = [16, 16], strides = [1, 1]} : vector<16x32xf32> to vector<16x16xf32>
    %42 = vector.shape_cast %41 : vector<16x16xf32> to vector<2x8x16xf32>
    %43 = vector.extract_strided_slice %13 {offsets = [0, 16], sizes = [16, 16], strides = [1, 1]} : vector<16x32xf32> to vector<16x16xf32>
    %44 = vector.shape_cast %43 : vector<16x16xf32> to vector<2x8x16xf32>
    "tpu.trace_start"() <{level = 10 : i32, message = "bqd,bkd->bqk"}> : () -> ()
    %cst_15 = arith.constant dense<0.000000e+00> : vector<2x8x8xf32>
    %45 = tpu.matmul %40, %42, %cst_15 {dimension_numbers = #tpu.dot_dimension_numbers<[2], [2], [1], [1], [0, 0, 0, 1, 1, 1], [0], [0]>} : vector<2x8x16xf32>, vector<2x8x16xf32>, vector<2x8x8xf32> -> vector<2x8x8xf32>
    "tpu.trace_stop"() : () -> ()
    %cst_16 = arith.constant 2.500000e-01 : f32
    %46 = vector.broadcast %cst_16 : f32 to vector<2x8x8xf32>
    %47 = arith.mulf %45, %46 : vector<2x8x8xf32>
    %48 = vector.broadcast %15 : vector<2x1x8xf32> to vector<2x8x8xf32>
    %49 = arith.addf %47, %48 : vector<2x8x8xf32>
    %cst_17 = arith.constant dense<0xFF800000> : vector<2x8xf32>
    %50 = vector.multi_reduction <maximumf>, %49, %cst_17 [2] : vector<2x8x8xf32> to vector<2x8xf32>
    %51 = vector.shape_cast %50 : vector<2x8xf32> to vector<2x8x1xf32>
    %52 = vector.broadcast %51 : vector<2x8x1xf32> to vector<2x8x8xf32>
    %53 = arith.subf %49, %52 : vector<2x8x8xf32>
    %54 = math.exp %53 : vector<2x8x8xf32>
    %cst_18 = arith.constant dense<0.000000e+00> : vector<2x8xf32>
    %55 = vector.multi_reduction <add>, %54, %cst_18 [2] : vector<2x8x8xf32> to vector<2x8xf32>
    %56 = vector.shape_cast %55 : vector<2x8xf32> to vector<2x8x1xf32>
    %57 = tpu.reciprocal %56 {approx = true} : vector<2x8x1xf32> -> vector<2x8x1xf32>
    %58 = vector.broadcast %57 : vector<2x8x1xf32> to vector<2x8x8xf32>
    %59 = arith.mulf %54, %58 : vector<2x8x8xf32>
    "tpu.trace_start"() <{level = 10 : i32, message = "bqk,bkd->bqd"}> : () -> ()
    %cst_19 = arith.constant dense<0.000000e+00> : vector<2x8x16xf32>
    %60 = tpu.matmul %59, %44, %cst_19 {dimension_numbers = #tpu.dot_dimension_numbers<[2], [1], [1], [2], [0, 0, 0, 1, 1, 2], [0], [0]>} : vector<2x8x8xf32>, vector<2x8x16xf32>, vector<2x8x16xf32> -> vector<2x8x16xf32>
    "tpu.trace_stop"() : () -> ()
    %61 = vector.shape_cast %60 : vector<2x8x16xf32> to vector<16x16xf32>
    %62 = tpu.concatenate %38, %61 in 1 : vector<16x16xf32>, vector<16x16xf32> -> vector<16x32xf32>
    %c0_20 = arith.constant 0 : index
    %c0_21 = arith.constant 0 : index
    %c0_22 = arith.constant 0 : index
    %63 = vector.load %arg7[%c0_20, %c0_21, %c0_22] : memref<1x32x32xf32, #tpu.memory_space<vmem>>, vector<1x32x32xf32>
    %64 = vector.shape_cast %63 : vector<1x32x32xf32> to vector<32x32xf32>
    %cst_23 = arith.constant dense<0.000000e+00> : vector<16x32xf32>
    %65 = tpu.matmul %62, %64, %cst_23 {dimension_numbers = #tpu.dot_dimension_numbers<[1], [0], [0], [1], [0, 0, 1, 1], [], []>} : vector<16x32xf32>, vector<32x32xf32>, vector<16x32xf32> -> vector<16x32xf32>
    %c0_24 = arith.constant 0 : index
    %c0_25 = arith.constant 0 : index
    %c0_26 = arith.constant 0 : index
    %66 = vector.load %arg8[%c0_24, %c0_25, %c0_26] : memref<1x1x32xf32, #tpu.memory_space<vmem>>, vector<1x1x32xf32>
    %67 = vector.shape_cast %66 : vector<1x1x32xf32> to vector<1x32xf32>
    %68 = vector.broadcast %67 : vector<1x32xf32> to vector<16x32xf32>
    %69 = arith.addf %65, %68 : vector<16x32xf32>
    %70 = arith.addf %69, %3 : vector<16x32xf32>
    %c0_27 = arith.constant 0 : index
    %c0_28 = arith.constant 0 : index
    %c0_29 = arith.constant 0 : index
    %71 = vector.load %arg9[%c0_27, %c0_28, %c0_29] : memref<1x1x32xf32, #tpu.memory_space<vmem>>, vector<1x1x32xf32>
    %72 = vector.shape_cast %71 : vector<1x1x32xf32> to vector<1x32xf32>
    %c0_30 = arith.constant 0 : index
    %c0_31 = arith.constant 0 : index
    %c0_32 = arith.constant 0 : index
    %73 = vector.load %arg10[%c0_30, %c0_31, %c0_32] : memref<1x1x32xf32, #tpu.memory_space<vmem>>, vector<1x1x32xf32>
    %74 = vector.shape_cast %73 : vector<1x1x32xf32> to vector<1x32xf32>
    %cst_33 = arith.constant dense<0.000000e+00> : vector<16xf32>
    %75 = vector.multi_reduction <add>, %70, %cst_33 [1] : vector<16x32xf32> to vector<16xf32>
    %76 = vector.shape_cast %75 : vector<16xf32> to vector<16x1xf32>
    %cst_34 = arith.constant 3.200000e+01 : f32
    %77 = vector.broadcast %cst_34 : f32 to vector<16x1xf32>
    %78 = arith.divf %76, %77 : vector<16x1xf32>
    %79 = vector.broadcast %78 : vector<16x1xf32> to vector<16x32xf32>
    %80 = arith.subf %70, %79 : vector<16x32xf32>
    %81 = arith.mulf %80, %80 : vector<16x32xf32>
    %cst_35 = arith.constant dense<0.000000e+00> : vector<16xf32>
    %82 = vector.multi_reduction <add>, %81, %cst_35 [1] : vector<16x32xf32> to vector<16xf32>
    %83 = vector.shape_cast %82 : vector<16xf32> to vector<16x1xf32>
    %cst_36 = arith.constant 3.200000e+01 : f32
    %84 = vector.broadcast %cst_36 : f32 to vector<16x1xf32>
    %85 = arith.divf %83, %84 : vector<16x1xf32>
    %cst_37 = arith.constant 9.99999996E-13 : f32
    %86 = vector.broadcast %cst_37 : f32 to vector<16x1xf32>
    %87 = arith.addf %85, %86 : vector<16x1xf32>
    %88 = math.rsqrt %87 : vector<16x1xf32>
    %89 = vector.broadcast %88 : vector<16x1xf32> to vector<16x32xf32>
    %90 = arith.mulf %80, %89 : vector<16x32xf32>
    %91 = vector.broadcast %72 : vector<1x32xf32> to vector<16x32xf32>
    %92 = arith.mulf %90, %91 : vector<16x32xf32>
    %93 = vector.broadcast %74 : vector<1x32xf32> to vector<16x32xf32>
    %94 = arith.addf %92, %93 : vector<16x32xf32>
    %c0_38 = arith.constant 0 : index
    %c0_39 = arith.constant 0 : index
    %c0_40 = arith.constant 0 : index
    %95 = vector.load %arg11[%c0_38, %c0_39, %c0_40] : memref<1x32x64xf32, #tpu.memory_space<vmem>>, vector<1x32x64xf32>
    %96 = vector.shape_cast %95 : vector<1x32x64xf32> to vector<32x64xf32>
    %cst_41 = arith.constant dense<0.000000e+00> : vector<16x64xf32>
    %97 = tpu.matmul %94, %96, %cst_41 {dimension_numbers = #tpu.dot_dimension_numbers<[1], [0], [0], [1], [0, 0, 1, 1], [], []>} : vector<16x32xf32>, vector<32x64xf32>, vector<16x64xf32> -> vector<16x64xf32>
    %c0_42 = arith.constant 0 : index
    %c0_43 = arith.constant 0 : index
    %c0_44 = arith.constant 0 : index
    %98 = vector.load %arg12[%c0_42, %c0_43, %c0_44] : memref<1x1x64xf32, #tpu.memory_space<vmem>>, vector<1x1x64xf32>
    %99 = vector.shape_cast %98 : vector<1x1x64xf32> to vector<1x64xf32>
    %100 = vector.broadcast %99 : vector<1x64xf32> to vector<16x64xf32>
    %101 = arith.addf %97, %100 : vector<16x64xf32>
    %cst_45 = arith.constant 5.000000e-01 : f32
    %102 = vector.broadcast %cst_45 : f32 to vector<16x64xf32>
    %103 = arith.mulf %102, %101 : vector<16x64xf32>
    %cst_46 = arith.constant 4.471500e-02 : f32
    %104 = vector.broadcast %cst_46 : f32 to vector<16x64xf32>
    %105 = arith.mulf %104, %101 : vector<16x64xf32>
    %106 = arith.mulf %105, %101 : vector<16x64xf32>
    %107 = arith.mulf %106, %101 : vector<16x64xf32>
    %108 = arith.addf %101, %107 : vector<16x64xf32>
    %cst_47 = arith.constant 0.797884583 : f32
    %109 = vector.broadcast %cst_47 : f32 to vector<16x64xf32>
    %110 = arith.mulf %109, %108 : vector<16x64xf32>
    %111 = math.tanh %110 : vector<16x64xf32>
    %cst_48 = arith.constant 1.000000e+00 : f32
    %112 = vector.broadcast %cst_48 : f32 to vector<16x64xf32>
    %113 = arith.addf %112, %111 : vector<16x64xf32>
    %114 = arith.mulf %103, %113 : vector<16x64xf32>
    %c0_49 = arith.constant 0 : index
    %c0_50 = arith.constant 0 : index
    %c0_51 = arith.constant 0 : index
    %115 = vector.load %arg13[%c0_49, %c0_50, %c0_51] : memref<1x64x32xf32, #tpu.memory_space<vmem>>, vector<1x64x32xf32>
    %116 = vector.shape_cast %115 : vector<1x64x32xf32> to vector<64x32xf32>
    %cst_52 = arith.constant dense<0.000000e+00> : vector<16x32xf32>
    %117 = tpu.matmul %114, %116, %cst_52 {dimension_numbers = #tpu.dot_dimension_numbers<[1], [0], [0], [1], [0, 0, 1, 1], [], []>} : vector<16x64xf32>, vector<64x32xf32>, vector<16x32xf32> -> vector<16x32xf32>
    %c0_53 = arith.constant 0 : index
    %c0_54 = arith.constant 0 : index
    %c0_55 = arith.constant 0 : index
    %118 = vector.load %arg14[%c0_53, %c0_54, %c0_55] : memref<1x1x32xf32, #tpu.memory_space<vmem>>, vector<1x1x32xf32>
    %119 = vector.shape_cast %118 : vector<1x1x32xf32> to vector<1x32xf32>
    %120 = vector.broadcast %119 : vector<1x32xf32> to vector<16x32xf32>
    %121 = arith.addf %117, %120 : vector<16x32xf32>
    %122 = arith.addf %121, %94 : vector<16x32xf32>
    %c0_56 = arith.constant 0 : index
    %c0_57 = arith.constant 0 : index
    %c0_58 = arith.constant 0 : index
    %123 = vector.load %arg15[%c0_56, %c0_57, %c0_58] : memref<1x1x32xf32, #tpu.memory_space<vmem>>, vector<1x1x32xf32>
    %124 = vector.shape_cast %123 : vector<1x1x32xf32> to vector<1x32xf32>
    %c0_59 = arith.constant 0 : index
    %c0_60 = arith.constant 0 : index
    %c0_61 = arith.constant 0 : index
    %125 = vector.load %arg16[%c0_59, %c0_60, %c0_61] : memref<1x1x32xf32, #tpu.memory_space<vmem>>, vector<1x1x32xf32>
    %126 = vector.shape_cast %125 : vector<1x1x32xf32> to vector<1x32xf32>
    %cst_62 = arith.constant dense<0.000000e+00> : vector<16xf32>
    %127 = vector.multi_reduction <add>, %122, %cst_62 [1] : vector<16x32xf32> to vector<16xf32>
    %128 = vector.shape_cast %127 : vector<16xf32> to vector<16x1xf32>
    %cst_63 = arith.constant 3.200000e+01 : f32
    %129 = vector.broadcast %cst_63 : f32 to vector<16x1xf32>
    %130 = arith.divf %128, %129 : vector<16x1xf32>
    %131 = vector.broadcast %130 : vector<16x1xf32> to vector<16x32xf32>
    %132 = arith.subf %122, %131 : vector<16x32xf32>
    %133 = arith.mulf %132, %132 : vector<16x32xf32>
    %cst_64 = arith.constant dense<0.000000e+00> : vector<16xf32>
    %134 = vector.multi_reduction <add>, %133, %cst_64 [1] : vector<16x32xf32> to vector<16xf32>
    %135 = vector.shape_cast %134 : vector<16xf32> to vector<16x1xf32>
    %cst_65 = arith.constant 3.200000e+01 : f32
    %136 = vector.broadcast %cst_65 : f32 to vector<16x1xf32>
    %137 = arith.divf %135, %136 : vector<16x1xf32>
    %cst_66 = arith.constant 9.99999996E-13 : f32
    %138 = vector.broadcast %cst_66 : f32 to vector<16x1xf32>
    %139 = arith.addf %137, %138 : vector<16x1xf32>
    %140 = math.rsqrt %139 : vector<16x1xf32>
    %141 = vector.broadcast %140 : vector<16x1xf32> to vector<16x32xf32>
    %142 = arith.mulf %132, %141 : vector<16x32xf32>
    %143 = vector.broadcast %124 : vector<1x32xf32> to vector<16x32xf32>
    %144 = arith.mulf %142, %143 : vector<16x32xf32>
    %145 = vector.broadcast %126 : vector<1x32xf32> to vector<16x32xf32>
    %146 = arith.addf %144, %145 : vector<16x32xf32>
    %c0_67 = arith.constant 0 : index
    %c0_68 = arith.constant 0 : index
    %147 = vector.load %arg17[%c0_67, %c0_68] : memref<16x32xf32, #tpu.memory_space<vmem>>, vector<16x32xf32>
    tpu.vector_store %arg17[%c0_67, %c0_68], %146 {strides = array<i32>} : memref<16x32xf32, #tpu.memory_space<vmem>>, vector<16x32xf32>,
    return
  }
  func.func @transform_0(%arg0: i32) -> (i32, i32) {
    %c0_i32 = arith.constant 0 : i32
    %c0_i32_0 = arith.constant 0 : i32
    %c0_i32_1 = arith.constant 0 : i32
    return %c0_i32, %c0_i32_0 : i32, i32
  }
  func.func @transform_1(%arg0: i32) -> (i32, i32) {
    %c0_i32 = arith.constant 0 : i32
    %c0_i32_0 = arith.constant 0 : i32
    %c0_i32_1 = arith.constant 0 : i32
    return %c0_i32, %c0_i32_0 : i32, i32
  }
  func.func @transform_2(%arg0: i32) -> (i32, i32) {
    %c0_i32 = arith.constant 0 : i32
    %c0_i32_0 = arith.constant 0 : i32
    %c0_i32_1 = arith.constant 0 : i32
    return %c0_i32, %c0_i32_0 : i32, i32
  }
  func.func @transform_3(%arg0: i32) -> (i32, i32) {
    %c0_i32 = arith.constant 0 : i32
    %c0_i32_0 = arith.constant 0 : i32
    %c0_i32_1 = arith.constant 0 : i32
    return %c0_i32, %c0_i32_0 : i32, i32
  }
  func.func @transform_4(%arg0: i32) -> (i32, i32, i32) {
    %c0_i32 = arith.constant 0 : i32
    %c0_i32_0 = arith.constant 0 : i32
    %c0_i32_1 = arith.constant 0 : i32
    return %arg0, %c0_i32, %c0_i32_0 : i32, i32, i32
  }
  func.func @transform_5(%arg0: i32) -> (i32, i32, i32) {
    %c0_i32 = arith.constant 0 : i32
    %c0_i32_0 = arith.constant 0 : i32
    %c0_i32_1 = arith.constant 0 : i32
    return %arg0, %c0_i32, %c0_i32_0 : i32, i32, i32
  }
  func.func @transform_6(%arg0: i32) -> (i32, i32, i32) {
    %c0_i32 = arith.constant 0 : i32
    %c0_i32_0 = arith.constant 0 : i32
    %c0_i32_1 = arith.constant 0 : i32
    return %arg0, %c0_i32, %c0_i32_0 : i32, i32, i32
  }
  func.func @transform_7(%arg0: i32) -> (i32, i32, i32) {
    %c0_i32 = arith.constant 0 : i32
    %c0_i32_0 = arith.constant 0 : i32
    %c0_i32_1 = arith.constant 0 : i32
    return %arg0, %c0_i32, %c0_i32_0 : i32, i32, i32
  }
  func.func @transform_8(%arg0: i32) -> (i32, i32, i32) {
    %c0_i32 = arith.constant 0 : i32
    %c0_i32_0 = arith.constant 0 : i32
    %c0_i32_1 = arith.constant 0 : i32
    return %arg0, %c0_i32, %c0_i32_0 : i32, i32, i32
  }
  func.func @transform_9(%arg0: i32) -> (i32, i32, i32) {
    %c0_i32 = arith.constant 0 : i32
    %c0_i32_0 = arith.constant 0 : i32
    %c0_i32_1 = arith.constant 0 : i32
    return %arg0, %c0_i32, %c0_i32_0 : i32, i32, i32
  }
  func.func @transform_10(%arg0: i32) -> (i32, i32, i32) {
    %c0_i32 = arith.constant 0 : i32
    %c0_i32_0 = arith.constant 0 : i32
    %c0_i32_1 = arith.constant 0 : i32
    return %arg0, %c0_i32, %c0_i32_0 : i32, i32, i32
  }
  func.func @transform_11(%arg0: i32) -> (i32, i32, i32) {
    %c0_i32 = arith.constant 0 : i32
    %c0_i32_0 = arith.constant 0 : i32
    %c0_i32_1 = arith.constant 0 : i32
    return %arg0, %c0_i32, %c0_i32_0 : i32, i32, i32
  }
  func.func @transform_12(%arg0: i32) -> (i32, i32, i32) {
    %c0_i32 = arith.constant 0 : i32
    %c0_i32_0 = arith.constant 0 : i32
    %c0_i32_1 = arith.constant 0 : i32
    return %arg0, %c0_i32, %c0_i32_0 : i32, i32, i32
  }
  func.func @transform_13(%arg0: i32) -> (i32, i32, i32) {
    %c0_i32 = arith.constant 0 : i32
    %c0_i32_0 = arith.constant 0 : i32
    %c0_i32_1 = arith.constant 0 : i32
    return %arg0, %c0_i32, %c0_i32_0 : i32, i32, i32
  }
  func.func @transform_14(%arg0: i32) -> (i32, i32, i32) {
    %c0_i32 = arith.constant 0 : i32
    %c0_i32_0 = arith.constant 0 : i32
    %c0_i32_1 = arith.constant 0 : i32
    return %arg0, %c0_i32, %c0_i32_0 : i32, i32, i32
  }
  func.func @transform_15(%arg0: i32) -> (i32, i32, i32) {
    %c0_i32 = arith.constant 0 : i32
    %c0_i32_0 = arith.constant 0 : i32
    %c0_i32_1 = arith.constant 0 : i32
    return %arg0, %c0_i32, %c0_i32_0 : i32, i32, i32
  }
  func.func @transform_16(%arg0: i32) -> (i32, i32) {
    %c0_i32 = arith.constant 0 : i32
    %c0_i32_0 = arith.constant 0 : i32
    %c0_i32_1 = arith.constant 0 : i32
    return %c0_i32, %c0_i32_0 : i32, i32
  }
}

</mosaic_0001>

<llo_original>
// kernel: _lambda_.3
$region0: #{_lambda_.3}
  #allocation0 [shape = 'u32[]', space=smem, size = 0x4, offset = 0x4, fixed_abs, tag = 'smem constant byte address 0x4 - core index']
  #allocation1 [shape = 'u32[144,128]{1,0:T(1,128)}', space=vmem, size = 0x12000, scoped, tag = 'internal scratch']
  %s0 = inlined_call_operand.vmem [shape: f32[2,32], index: 0, kind: input, shape index: {}]
  %s1 = inlined_call_operand.vmem [shape: f32[32,32], index: 1, kind: input, shape index: {}]
  %s2 = inlined_call_operand.vmem [shape: f32[1,32], index: 2, kind: input, shape index: {}]
  %s3 = inlined_call_operand.vmem [shape: f32[32,3], index: 3, kind: input, shape index: {}]
  %s4 = inlined_call_operand.vmem [shape: f32[1,3], index: 4, kind: input, shape index: {}]
  %s5 = inlined_call_operand.hbm [shape: f32[2,3], index: 5, kind: output, shape index: {}]
  %s6 = sld [smem:[#allocation0]]
  $region30: #{_lambda_.3} parent=0
    _
  %s8 = ssub.s32 1, %s6
  %s9 = scalar_select 0, %s8, %s6
  $region1: #{_lambda_.3} parent=0
    #allocation2 [shape = 'u8[1024]{0}', space=vmem, size = 0x400, scoped, tag = 'output window, operand 0, single buffered']
    #allocation3 [shape = 's32[1]{0}', space=sflag, size = 0x4, scoped, tag = 'scoped memory for _lambda_.3']
    %10 = vsyncpa [#allocation3], 0
    // Predicated region
    $region2: #{_lambda_.3} parent=1 // pred_check
      _
    $region3: #{_lambda_.3} parent=1 // pred_check_branch
      %12 = sbr.rel (0) target = $region5
    $region4: #{_lambda_.3} parent=1 // pred_region
      _
    $region5: #{_lambda_.3} parent=1 // pred_fallthru
      _
    // Predicated region
    $region6: #{_lambda_.3} parent=1 // pred_check
      _
    $region7: #{_lambda_.3} parent=1 // pred_check_branch
      %14 = sbr.rel (0) target = $region9
    $region8: #{_lambda_.3} parent=1 // pred_region
      _
    $region9: #{_lambda_.3} parent=1 // pred_fallthru
      _
    // Predicated region
    $region10: #{_lambda_.3} parent=1 // pred_check
      _
    $region11: #{_lambda_.3} parent=1 // pred_check_branch
      %16 = sbr.rel (0) target = $region13
    $region12: #{_lambda_.3} parent=1 // pred_region
      _
    $region13: #{_lambda_.3} parent=1 // pred_fallthru
      _
    // Predicated region
    $region14: #{_lambda_.3} parent=1 // pred_check
      _
    $region15: #{_lambda_.3} parent=1 // pred_check_branch
      %18 = sbr.rel (0) target = $region17
    $region16: #{_lambda_.3} parent=1 // pred_region
      _
    $region17: #{_lambda_.3} parent=1 // pred_fallthru
      _
    // Predicated region
    $region18: #{_lambda_.3} parent=1 // pred_check
      _
    $region19: #{_lambda_.3} parent=1 // pred_check_branch
      %20 = sbr.rel (0) target = $region21
    $region20: #{_lambda_.3} parent=1 // pred_region
      _
    $region21: #{_lambda_.3} parent=1 // pred_fallthru
      _
    %v21 = vld [vmem:[%s0] sm:$0x3]
    %v22 = vld [vmem:[%s1] sm:$0xff]
    %v23 = vld [vmem:[%s1 + $0x8] sm:$0xff]
    %v24 = vld [vmem:[%s1 + $0x10] sm:$0xff]
    %v25 = vld [vmem:[%s1 + $0x18] sm:$0xff]
    %v26 = vld [vmem:[%s2] sm:$0x1]
    %v28 = vlaneseq
    %v29 = vshrl.u32 %v28, 7
    %v30 = vsub.s32 0, %v29
    %v31 = vrot.slane %v26, %v30
    %vm33 = vcmask 261120
    %v35 = vsel %vm33, %v21, 0
    %37 = vmatprep.subr.mxu0 0.0
    %38 = vmatpush1.msra.mxu0 %v22
    %39 = vmatprep.subr.mxu0 0.0
    %40 = vmatpush1.msra.mxu0 %v23
    %41 = vmatprep.subr.mxu0 0.0
    %42 = vmatpush1.msra.mxu0 %v24
    %43 = vmatprep.subr.mxu0 0.0
    %44 = vmatpush1.msra.mxu0 %v25
    %45 = vmatprep.subr.mxu0 0.0
    %46 = vmatpush1.msra.mxu0 0.0
    %47 = vmatprep.subr.mxu0 0.0
    %48 = vmatpush1.msra.mxu0 0.0
    %49 = vmatprep.subr.mxu0 0.0
    %50 = vmatpush1.msra.mxu0 0.0
    %51 = vmatprep.subr.mxu0 0.0
    %52 = vmatpush1.msra.mxu0 0.0
    %53 = vmatprep.subr.mxu0 0.0
    %54 = vmatpush1.msra.mxu0 0.0
    %55 = vmatprep.subr.mxu0 0.0
    %56 = vmatpush1.msra.mxu0 0.0
    %57 = vmatprep.subr.mxu0 0.0
    %58 = vmatpush1.msra.mxu0 0.0
    %59 = vmatprep.subr.mxu0 0.0
    %60 = vmatpush1.msra.mxu0 0.0
    %61 = vmatprep.subr.mxu0 0.0
    %62 = vmatpush1.msra.mxu0 0.0
    %63 = vmatprep.subr.mxu0 0.0
    %64 = vmatpush1.msra.mxu0 0.0
    %65 = vmatprep.subr.mxu0 0.0
    %66 = vmatpush1.msra.mxu0 0.0
    %67 = vmatprep.subr.mxu0 0.0
    %68 = vmatpush1.msra.mxu0 0.0
    %69 = vmatprep.subr.mxu0 0.0
    %70 = vmatpush1.msra.mxu0 0.0
    %71 = vmatprep.subr.mxu0 0.0
    %72 = vmatpush1.msra.mxu0 0.0
    %73 = vmatprep.subr.mxu0 0.0
    %74 = vmatpush1.msra.mxu0 0.0
    %75 = vmatprep.subr.mxu0 0.0
    %76 = vmatpush1.msra.mxu0 0.0
    %77 = vmatprep.subr.mxu0 0.0
    %78 = vmatpush1.msra.mxu0 0.0
    %79 = vmatprep.subr.mxu0 0.0
    %80 = vmatpush1.msra.mxu0 0.0
    %81 = vmatprep.subr.mxu0 0.0
    %82 = vmatpush1.msra.mxu0 0.0
    %83 = vmatprep.subr.mxu0 0.0
    %84 = vmatpush1.msra.mxu0 0.0
    %85 = vmatprep.subr.mxu0 0.0
    %86 = vmatpush1.msra.mxu0 0.0
    %87 = vmatprep.subr.mxu0 0.0
    %88 = vmatpush1.msra.mxu0 0.0
    %89 = vmatprep.subr.mxu0 0.0
    %90 = vmatpush1.msra.mxu0 0.0
    %91 = vmatprep.subr.mxu0 0.0
    %92 = vmatpush1.msra.mxu0 0.0
    %93 = vmatprep.subr.mxu0 0.0
    %94 = vmatpush1.msra.mxu0 0.0
    %95 = vmatprep.subr.mxu0 0.0
    %96 = vmatpush1.msra.mxu0 0.0
    %97 = vmatprep.subr.mxu0 0.0
    %98 = vmatpush1.msra.mxu0 0.0
    %99 = vmatprep.subr.mxu0 0.0
    %100 = vmatpush1.msra.mxu0 0.0
    %101 = vmatprep.mubr.f32.mxu0 0.0
    %102 = vmatmul.mubr.f32.gmra.mrb[0].mxu0 %v35
    %v103 = vpop.f32.mrb[0].mxu0
    %v104 = vadd.f32 %v31, %v103
    %v105 = vpop.f32.mrb[0].mxu0
    %106 = vdwg.mxu0
    %v107 = vtanh.pop %v104
    %v108 = vld [vmem:[%s3] sm:$0xff]
    %v109 = vld [vmem:[%s3 + $0x8] sm:$0xff]
    %v110 = vld [vmem:[%s3 + $0x10] sm:$0xff]
    %v111 = vld [vmem:[%s3 + $0x18] sm:$0xff]
    %v112 = vld [vmem:[%s4] sm:$0x1]
    %v114 = vlaneseq
    %v115 = vshrl.u32 %v114, 7
    %v116 = vsub.s32 0, %v115
    %v117 = vrot.slane %v112, %v116
    %v120 = vsel %vm33, %v107, 0
    %122 = vmatprep.subr.mxu0 0.0
    %123 = vmatpush1.msra.mxu0 %v108
    %124 = vmatprep.subr.mxu0 0.0
    %125 = vmatpush1.msra.mxu0 %v109
    %126 = vmatprep.subr.mxu0 0.0
    %127 = vmatpush1.msra.mxu0 %v110
    %128 = vmatprep.subr.mxu0 0.0
    %129 = vmatpush1.msra.mxu0 %v111
    %130 = vmatprep.subr.mxu0 0.0
    %131 = vmatpush1.msra.mxu0 0.0
    %132 = vmatprep.subr.mxu0 0.0
    %133 = vmatpush1.msra.mxu0 0.0
    %134 = vmatprep.subr.mxu0 0.0
    %135 = vmatpush1.msra.mxu0 0.0
    %136 = vmatprep.subr.mxu0 0.0
    %137 = vmatpush1.msra.mxu0 0.0
    %138 = vmatprep.subr.mxu0 0.0
    %139 = vmatpush1.msra.mxu0 0.0
    %140 = vmatprep.subr.mxu0 0.0
    %141 = vmatpush1.msra.mxu0 0.0
    %142 = vmatprep.subr.mxu0 0.0
    %143 = vmatpush1.msra.mxu0 0.0
    %144 = vmatprep.subr.mxu0 0.0
    %145 = vmatpush1.msra.mxu0 0.0
    %146 = vmatprep.subr.mxu0 0.0
    %147 = vmatpush1.msra.mxu0 0.0
    %148 = vmatprep.subr.mxu0 0.0
    %149 = vmatpush1.msra.mxu0 0.0
    %150 = vmatprep.subr.mxu0 0.0
    %151 = vmatpush1.msra.mxu0 0.0
    %152 = vmatprep.subr.mxu0 0.0
    %153 = vmatpush1.msra.mxu0 0.0
    %154 = vmatprep.subr.mxu0 0.0
    %155 = vmatpush1.msra.mxu0 0.0
    %156 = vmatprep.subr.mxu0 0.0
    %157 = vmatpush1.msra.mxu0 0.0
    %158 = vmatprep.subr.mxu0 0.0
    %159 = vmatpush1.msra.mxu0 0.0
    %160 = vmatprep.subr.mxu0 0.0
    %161 = vmatpush1.msra.mxu0 0.0
    %162 = vmatprep.subr.mxu0 0.0
    %163 = vmatpush1.msra.mxu0 0.0
    %164 = vmatprep.subr.mxu0 0.0
    %165 = vmatpush1.msra.mxu0 0.0
    %166 = vmatprep.subr.mxu0 0.0
    %167 = vmatpush1.msra.mxu0 0.0
    %168 = vmatprep.subr.mxu0 0.0
    %169 = vmatpush1.msra.mxu0 0.0
    %170 = vmatprep.subr.mxu0 0.0
    %171 = vmatpush1.msra.mxu0 0.0
    %172 = vmatprep.subr.mxu0 0.0
    %173 = vmatpush1.msra.mxu0 0.0
    %174 = vmatprep.subr.mxu0 0.0
    %175 = vmatpush1.msra.mxu0 0.0
    %176 = vmatprep.subr.mxu0 0.0
    %177 = vmatpush1.msra.mxu0 0.0
    %178 = vmatprep.subr.mxu0 0.0
    %179 = vmatpush1.msra.mxu0 0.0
    %180 = vmatprep.subr.mxu0 0.0
    %181 = vmatpush1.msra.mxu0 0.0
    %182 = vmatprep.subr.mxu0 0.0
    %183 = vmatpush1.msra.mxu0 0.0
    %184 = vmatprep.subr.mxu0 0.0
    %185 = vmatpush1.msra.mxu0 0.0
    %186 = vmatprep.mubr.f32.mxu0 0.0
    %187 = vmatmul.mubr.f32.gmra.mrb[0].mxu0 %v120
    %v188 = vpop.f32.mrb[0].mxu0
    %v189 = vadd.f32 %v117, %v188
    %v190 = vpop.f32.mrb[0].mxu0
    %191 = vdwg.mxu0
    %vm192 = vcmask 17408
    %193 = vst.msk [vmem:[#allocation2] sm:$0x3] %vm192, %v189
    // Predicated region
    $region22: #{_lambda_.3} parent=1 // pred_check
      _
    $region23: #{_lambda_.3} parent=1 // pred_check_branch
      %195 = sbr.rel (0) target = $region25
    $region24: #{_lambda_.3} parent=1 // pred_region
      %s197 = ssub.s32 32, 32
      %198 = vsyncadd [#allocation3], %s197
      %s200 = sshll.u32 [#allocation2], 4
      %s201 = int_to_ptr.vmem [resolvable:$true] %s200
      %203 = dma.vmem_to_hbm [thread:$0]  %s201, 32, %s5, [#allocation3]
    $region25: #{_lambda_.3} parent=1 // pred_fallthru
      _
    // Predicated region
    $region26: #{_lambda_.3} parent=1 // pred_check
      _
    $region27: #{_lambda_.3} parent=1 // pred_check_branch
      %205 = sbr.rel (0) target = $region29
    $region28: #{_lambda_.3} parent=1 // pred_region
      %206 = dma.done [#allocation3], 32
    $region29: #{_lambda_.3} parent=1 // pred_fallthru
      _
    %207 = vsyncpa [#allocation3], 1

// kernel: _lambda_.2
$region0: #{_lambda_.2}
  #allocation0 [shape = 'u32[]', space=smem, size = 0x4, offset = 0x4, fixed_abs, tag = 'smem constant byte address 0x4 - core index']
  #allocation1 [shape = 'u32[144,128]{1,0:T(1,128)}', space=vmem, size = 0x12000, scoped, tag = 'internal scratch']
  %s0 = inlined_call_operand.vmem [shape: f32[16,32], index: 0, kind: input, shape index: {}]
  %s1 = inlined_call_operand.vmem [shape: f32[2,8], index: 1, kind: input, shape index: {}]
  %s2 = inlined_call_operand.vmem [shape: f32[1,32], index: 2, kind: input, shape index: {}]
  %s3 = inlined_call_operand.vmem [shape: f32[1,32], index: 3, kind: input, shape index: {}]
  %s4 = inlined_call_operand.vmem [shape: f32[2,32,96], index: 4, kind: input, shape index: {}]
  %s5 = inlined_call_operand.vmem [shape: f32[2,1,96], index: 5, kind: input, shape index: {}]
  %s6 = inlined_call_operand.vmem [shape: f32[2,32,32], index: 6, kind: input, shape index: {}]
  %s7 = inlined_call_operand.vmem [shape: f32[2,1,32], index: 7, kind: input, shape index: {}]
  %s8 = inlined_call_operand.vmem [shape: f32[2,1,32], index: 8, kind: input, shape index: {}]
  %s9 = inlined_call_operand.vmem [shape: f32[2,1,32], index: 9, kind: input, shape index: {}]
  %s10 = inlined_call_operand.vmem [shape: f32[2,32,64], index: 10, kind: input, shape index: {}]
  %s11 = inlined_call_operand.vmem [shape: f32[2,1,64], index: 11, kind: input, shape index: {}]
  %s12 = inlined_call_operand.vmem [shape: f32[2,64,32], index: 12, kind: input, shape index: {}]
  %s13 = inlined_call_operand.vmem [shape: f32[2,1,32], index: 13, kind: input, shape index: {}]
  %s14 = inlined_call_operand.vmem [shape: f32[2,1,32], index: 14, kind: input, shape index: {}]
  %s15 = inlined_call_operand.vmem [shape: f32[2,1,32], index: 15, kind: input, shape index: {}]
  %s16 = inlined_call_operand.vmem [shape: f32[16,32], index: 16, kind: output, shape index: {}]
  %s17 = sld [smem:[#allocation0]]
  $region101: #{_lambda_.2} parent=0
    _
  %s19 = ssub.s32 1, %s17
  %s20 = scalar_select 0, %s19, %s17
  loop: start=0, step=1, limit=4
  $region2: #{_lambda_.2} parent=0 // loop_pre_header
    _
  $region3: #{_lambda_.2} parent=0 // loop_header
    %s22 = sphi 0, %s26
    %p23 = scmp.ge.s32.totalorder %s22, 4
    %s30 = sphi 0, %s30
    %s32 = sphi 0, %s30
    %s33 = sphi 0, %s32
    %s47 = sphi 0, %s33
    %s51 = sphi 0, %s51
    %s53 = sphi 0, %s51
    %s54 = sphi 0, %s53
    %s68 = sphi 0, %s54
    %s72 = sphi 0, %s72
    %s74 = sphi 0, %s72
    %s75 = sphi 0, %s74
    %s89 = sphi 0, %s75
    %s93 = sphi 0, %s93
    %s95 = sphi 0, %s93
    %s96 = sphi 0, %s95
    %s110 = sphi 0, %s96
    %s116 = sphi 0, %s118
    %s119 = sphi 0, %s116
    %s120 = sphi 0, %s119
    %s136 = sphi 0, %s120
    %s142 = sphi 0, %s144
    %s145 = sphi 0, %s142
    %s146 = sphi 0, %s145
    %s162 = sphi 0, %s146
    %s168 = sphi 0, %s170
    %s171 = sphi 0, %s168
    %s172 = sphi 0, %s171
    %s188 = sphi 0, %s172
    %s194 = sphi 0, %s196
    %s197 = sphi 0, %s194
    %s198 = sphi 0, %s197
    %s214 = sphi 0, %s198
    %s220 = sphi 0, %s222
    %s223 = sphi 0, %s220
    %s224 = sphi 0, %s223
    %s240 = sphi 0, %s224
    %s246 = sphi 0, %s248
    %s249 = sphi 0, %s246
    %s250 = sphi 0, %s249
    %s266 = sphi 0, %s250
    %s272 = sphi 0, %s274
    %s275 = sphi 0, %s272
    %s276 = sphi 0, %s275
    %s292 = sphi 0, %s276
    %s298 = sphi 0, %s300
    %s301 = sphi 0, %s298
    %s302 = sphi 0, %s301
    %s318 = sphi 0, %s302
    %s324 = sphi 0, %s326
    %s327 = sphi 0, %s324
    %s328 = sphi 0, %s327
    %s344 = sphi 0, %s328
    %s350 = sphi 0, %s352
    %s353 = sphi 0, %s350
    %s354 = sphi 0, %s353
    %s370 = sphi 0, %s354
    %s376 = sphi 0, %s378
    %s379 = sphi 0, %s376
    %s380 = sphi 0, %s379
    %s396 = sphi 0, %s380
    %s402 = sphi 0, %s404
    %s405 = sphi 0, %s402
    %s406 = sphi 0, %s405
    %s422 = sphi 0, %s406
    %s426 = sphi 0, %s426
    %s428 = sphi 0, %s426
    %s429 = sphi 0, %s428
    %s443 = sphi 0, %s429
  $region4: #{_lambda_.2} parent=0 // loop_header_branch
    %25 = sbr.rel (%p23) target = $region8
  $region5: #{_lambda_.2} parent=0 // loop_body
    %s27 = ssub.s32 %s22, 1
    %s28 = ssub.s32 %s22, 2
    %s29 = sadd.s32 %s22, 1
    %s31 = sadd.s32 %s30, 1
    %p34 = scmp.eq.s32.totalorder %s22, 1
    %p35 = scmp.ne.s32.totalorder %s30, %s32
    %p36 = scmp.eq.s32.totalorder %s22, 0
    %p37 = por %p35, %p36
    %p38 = scmp.ne.s32.totalorder %s30, %s32
    %p39 = scmp.eq.s32.totalorder %s27, 1
    %p40 = por %p38, %p39
    %p41 = scmp.ne.s32.totalorder %s32, %s33
    %p42 = scmp.eq.s32.totalorder %s27, 0
    %p43 = por %p41, %p42
    %p44 = scmp.ne.s32.totalorder %s32, %s33
    %p45 = scmp.eq.s32.totalorder %s28, 1
    %p46 = por %p44, %p45
    %p48 = scmp.ne.s32.totalorder %s33, %s47
    %p49 = scmp.eq.s32.totalorder %s28, 0
    %p50 = por %p48, %p49
    %s52 = sadd.s32 %s51, 1
    %p55 = scmp.eq.s32.totalorder %s22, 1
    %p56 = scmp.ne.s32.totalorder %s51, %s53
    %p57 = scmp.eq.s32.totalorder %s22, 0
    %p58 = por %p56, %p57
    %p59 = scmp.ne.s32.totalorder %s51, %s53
    %p60 = scmp.eq.s32.totalorder %s27, 1
    %p61 = por %p59, %p60
    %p62 = scmp.ne.s32.totalorder %s53, %s54
    %p63 = scmp.eq.s32.totalorder %s27, 0
    %p64 = por %p62, %p63
    %p65 = scmp.ne.s32.totalorder %s53, %s54
    %p66 = scmp.eq.s32.totalorder %s28, 1
    %p67 = por %p65, %p66
    %p69 = scmp.ne.s32.totalorder %s54, %s68
    %p70 = scmp.eq.s32.totalorder %s28, 0
    %p71 = por %p69, %p70
    %s73 = sadd.s32 %s72, 1
    %p76 = scmp.eq.s32.totalorder %s22, 1
    %p77 = scmp.ne.s32.totalorder %s72, %s74
    %p78 = scmp.eq.s32.totalorder %s22, 0
    %p79 = por %p77, %p78
    %p80 = scmp.ne.s32.totalorder %s72, %s74
    %p81 = scmp.eq.s32.totalorder %s27, 1
    %p82 = por %p80, %p81
    %p83 = scmp.ne.s32.totalorder %s74, %s75
    %p84 = scmp.eq.s32.totalorder %s27, 0
    %p85 = por %p83, %p84
    %p86 = scmp.ne.s32.totalorder %s74, %s75
    %p87 = scmp.eq.s32.totalorder %s28, 1
    %p88 = por %p86, %p87
    %p90 = scmp.ne.s32.totalorder %s75, %s89
    %p91 = scmp.eq.s32.totalorder %s28, 0
    %p92 = por %p90, %p91
    %s94 = sadd.s32 %s93, 1
    %p97 = scmp.eq.s32.totalorder %s22, 1
    %p98 = scmp.ne.s32.totalorder %s93, %s95
    %p99 = scmp.eq.s32.totalorder %s22, 0
    %p100 = por %p98, %p99
    %p101 = scmp.ne.s32.totalorder %s93, %s95
    %p102 = scmp.eq.s32.totalorder %s27, 1
    %p103 = por %p101, %p102
    %p104 = scmp.ne.s32.totalorder %s95, %s96
    %p105 = scmp.eq.s32.totalorder %s27, 0
    %p106 = por %p104, %p105
    %p107 = scmp.ne.s32.totalorder %s95, %s96
    %p108 = scmp.eq.s32.totalorder %s28, 1
    %p109 = por %p107, %p108
    %p111 = scmp.ne.s32.totalorder %s96, %s110
    %p112 = scmp.eq.s32.totalorder %s28, 0
    %p113 = por %p111, %p112
    %s114 = ssub.s32 %s22, %s29
    %p115 = scmp.eq.s32.totalorder %s114, 0
    %s117 = sadd.s32 %s116, 1
    %s118 = scalar_select %p115, %s116, %s117
    %p121 = pneg %p115
    %p122 = scmp.eq.s32.totalorder %s22, 1
    %p123 = por %p121, %p122
    %p124 = scmp.ne.s32.totalorder %s116, %s119
    %p125 = scmp.eq.s32.totalorder %s22, 0
    %p126 = por %p124, %p125
    %p127 = scmp.ne.s32.totalorder %s116, %s119
    %p128 = scmp.eq.s32.totalorder %s27, 1
    %p129 = por %p127, %p128
    %p130 = scmp.ne.s32.totalorder %s119, %s120
    %p131 = scmp.eq.s32.totalorder %s27, 0
    %p132 = por %p130, %p131
    %p133 = scmp.ne.s32.totalorder %s119, %s120
    %p134 = scmp.eq.s32.totalorder %s28, 1
    %p135 = por %p133, %p134
    %p137 = scmp.ne.s32.totalorder %s120, %s136
    %p138 = scmp.eq.s32.totalorder %s28, 0
    %p139 = por %p137, %p138
    %s140 = ssub.s32 %s22, %s29
    %p141 = scmp.eq.s32.totalorder %s140, 0
    %s143 = sadd.s32 %s142, 1
    %s144 = scalar_select %p141, %s142, %s143
    %p147 = pneg %p141
    %p148 = scmp.eq.s32.totalorder %s22, 1
    %p149 = por %p147, %p148
    %p150 = scmp.ne.s32.totalorder %s142, %s145
    %p151 = scmp.eq.s32.totalorder %s22, 0
    %p152 = por %p150, %p151
    %p153 = scmp.ne.s32.totalorder %s142, %s145
    %p154 = scmp.eq.s32.totalorder %s27, 1
    %p155 = por %p153, %p154
    %p156 = scmp.ne.s32.totalorder %s145, %s146
    %p157 = scmp.eq.s32.totalorder %s27, 0
    %p158 = por %p156, %p157
    %p159 = scmp.ne.s32.totalorder %s145, %s146
    %p160 = scmp.eq.s32.totalorder %s28, 1
    %p161 = por %p159, %p160
    %p163 = scmp.ne.s32.totalorder %s146, %s162
    %p164 = scmp.eq.s32.totalorder %s28, 0
    %p165 = por %p163, %p164
    %s166 = ssub.s32 %s22, %s29
    %p167 = scmp.eq.s32.totalorder %s166, 0
    %s169 = sadd.s32 %s168, 1
    %s170 = scalar_select %p167, %s168, %s169
    %p173 = pneg %p167
    %p174 = scmp.eq.s32.totalorder %s22, 1
    %p175 = por %p173, %p174
    %p176 = scmp.ne.s32.totalorder %s168, %s171
    %p177 = scmp.eq.s32.totalorder %s22, 0
    %p178 = por %p176, %p177
    %p179 = scmp.ne.s32.totalorder %s168, %s171
    %p180 = scmp.eq.s32.totalorder %s27, 1
    %p181 = por %p179, %p180
    %p182 = scmp.ne.s32.totalorder %s171, %s172
    %p183 = scmp.eq.s32.totalorder %s27, 0
    %p184 = por %p182, %p183
    %p185 = scmp.ne.s32.totalorder %s171, %s172
    %p186 = scmp.eq.s32.totalorder %s28, 1
    %p187 = por %p185, %p186
    %p189 = scmp.ne.s32.totalorder %s172, %s188
    %p190 = scmp.eq.s32.totalorder %s28, 0
    %p191 = por %p189, %p190
    %s192 = ssub.s32 %s22, %s29
    %p193 = scmp.eq.s32.totalorder %s192, 0
    %s195 = sadd.s32 %s194, 1
    %s196 = scalar_select %p193, %s194, %s195
    %p199 = pneg %p193
    %p200 = scmp.eq.s32.totalorder %s22, 1
    %p201 = por %p199, %p200
    %p202 = scmp.ne.s32.totalorder %s194, %s197
    %p203 = scmp.eq.s32.totalorder %s22, 0
    %p204 = por %p202, %p203
    %p205 = scmp.ne.s32.totalorder %s194, %s197
    %p206 = scmp.eq.s32.totalorder %s27, 1
    %p207 = por %p205, %p206
    %p208 = scmp.ne.s32.totalorder %s197, %s198
    %p209 = scmp.eq.s32.totalorder %s27, 0
    %p210 = por %p208, %p209
    %p211 = scmp.ne.s32.totalorder %s197, %s198
    %p212 = scmp.eq.s32.totalorder %s28, 1
    %p213 = por %p211, %p212
    %p215 = scmp.ne.s32.totalorder %s198, %s214
    %p216 = scmp.eq.s32.totalorder %s28, 0
    %p217 = por %p215, %p216
    %s218 = ssub.s32 %s22, %s29
    %p219 = scmp.eq.s32.totalorder %s218, 0
    %s221 = sadd.s32 %s220, 1
    %s222 = scalar_select %p219, %s220, %s221
    %p225 = pneg %p219
    %p226 = scmp.eq.s32.totalorder %s22, 1
    %p227 = por %p225, %p226
    %p228 = scmp.ne.s32.totalorder %s220, %s223
    %p229 = scmp.eq.s32.totalorder %s22, 0
    %p230 = por %p228, %p229
    %p231 = scmp.ne.s32.totalorder %s220, %s223
    %p232 = scmp.eq.s32.totalorder %s27, 1
    %p233 = por %p231, %p232
    %p234 = scmp.ne.s32.totalorder %s223, %s224
    %p235 = scmp.eq.s32.totalorder %s27, 0
    %p236 = por %p234, %p235
    %p237 = scmp.ne.s32.totalorder %s223, %s224
    %p238 = scmp.eq.s32.totalorder %s28, 1
    %p239 = por %p237, %p238
    %p241 = scmp.ne.s32.totalorder %s224, %s240
    %p242 = scmp.eq.s32.totalorder %s28, 0
    %p243 = por %p241, %p242
    %s244 = ssub.s32 %s22, %s29
    %p245 = scmp.eq.s32.totalorder %s244, 0
    %s247 = sadd.s32 %s246, 1
    %s248 = scalar_select %p245, %s246, %s247
    %p251 = pneg %p245
    %p252 = scmp.eq.s32.totalorder %s22, 1
    %p253 = por %p251, %p252
    %p254 = scmp.ne.s32.totalorder %s246, %s249
    %p255 = scmp.eq.s32.totalorder %s22, 0
    %p256 = por %p254, %p255
    %p257 = scmp.ne.s32.totalorder %s246, %s249
    %p258 = scmp.eq.s32.totalorder %s27, 1
    %p259 = por %p257, %p258
    %p260 = scmp.ne.s32.totalorder %s249, %s250
    %p261 = scmp.eq.s32.totalorder %s27, 0
    %p262 = por %p260, %p261
    %p263 = scmp.ne.s32.totalorder %s249, %s250
    %p264 = scmp.eq.s32.totalorder %s28, 1
    %p265 = por %p263, %p264
    %p267 = scmp.ne.s32.totalorder %s250, %s266
    %p268 = scmp.eq.s32.totalorder %s28, 0
    %p269 = por %p267, %p268
    %s270 = ssub.s32 %s22, %s29
    %p271 = scmp.eq.s32.totalorder %s270, 0
    %s273 = sadd.s32 %s272, 1
    %s274 = scalar_select %p271, %s272, %s273
    %p277 = pneg %p271
    %p278 = scmp.eq.s32.totalorder %s22, 1
    %p279 = por %p277, %p278
    %p280 = scmp.ne.s32.totalorder %s272, %s275
    %p281 = scmp.eq.s32.totalorder %s22, 0
    %p282 = por %p280, %p281
    %p283 = scmp.ne.s32.totalorder %s272, %s275
    %p284 = scmp.eq.s32.totalorder %s27, 1
    %p285 = por %p283, %p284
    %p286 = scmp.ne.s32.totalorder %s275, %s276
    %p287 = scmp.eq.s32.totalorder %s27, 0
    %p288 = por %p286, %p287
    %p289 = scmp.ne.s32.totalorder %s275, %s276
    %p290 = scmp.eq.s32.totalorder %s28, 1
    %p291 = por %p289, %p290
    %p293 = scmp.ne.s32.totalorder %s276, %s292
    %p294 = scmp.eq.s32.totalorder %s28, 0
    %p295 = por %p293, %p294
    %s296 = ssub.s32 %s22, %s29
    %p297 = scmp.eq.s32.totalorder %s296, 0
    %s299 = sadd.s32 %s298, 1
    %s300 = scalar_select %p297, %s298, %s299
    %p303 = pneg %p297
    %p304 = scmp.eq.s32.totalorder %s22, 1
    %p305 = por %p303, %p304
    %p306 = scmp.ne.s32.totalorder %s298, %s301
    %p307 = scmp.eq.s32.totalorder %s22, 0
    %p308 = por %p306, %p307
    %p309 = scmp.ne.s32.totalorder %s298, %s301
    %p310 = scmp.eq.s32.totalorder %s27, 1
    %p311 = por %p309, %p310
    %p312 = scmp.ne.s32.totalorder %s301, %s302
    %p313 = scmp.eq.s32.totalorder %s27, 0
    %p314 = por %p312, %p313
    %p315 = scmp.ne.s32.totalorder %s301, %s302
    %p316 = scmp.eq.s32.totalorder %s28, 1
    %p317 = por %p315, %p316
    %p319 = scmp.ne.s32.totalorder %s302, %s318
    %p320 = scmp.eq.s32.totalorder %s28, 0
    %p321 = por %p319, %p320
    %s322 = ssub.s32 %s22, %s29
    %p323 = scmp.eq.s32.totalorder %s322, 0
    %s325 = sadd.s32 %s324, 1
    %s326 = scalar_select %p323, %s324, %s325
    %p329 = pneg %p323
    %p330 = scmp.eq.s32.totalorder %s22, 1
    %p331 = por %p329, %p330
    %p332 = scmp.ne.s32.totalorder %s324, %s327
    %p333 = scmp.eq.s32.totalorder %s22, 0
    %p334 = por %p332, %p333
    %p335 = scmp.ne.s32.totalorder %s324, %s327
    %p336 = scmp.eq.s32.totalorder %s27, 1
    %p337 = por %p335, %p336
    %p338 = scmp.ne.s32.totalorder %s327, %s328
    %p339 = scmp.eq.s32.totalorder %s27, 0
    %p340 = por %p338, %p339
    %p341 = scmp.ne.s32.totalorder %s327, %s328
    %p342 = scmp.eq.s32.totalorder %s28, 1
    %p343 = por %p341, %p342
    %p345 = scmp.ne.s32.totalorder %s328, %s344
    %p346 = scmp.eq.s32.totalorder %s28, 0
    %p347 = por %p345, %p346
    %s348 = ssub.s32 %s22, %s29
    %p349 = scmp.eq.s32.totalorder %s348, 0
    %s351 = sadd.s32 %s350, 1
    %s352 = scalar_select %p349, %s350, %s351
    %p355 = pneg %p349
    %p356 = scmp.eq.s32.totalorder %s22, 1
    %p357 = por %p355, %p356
    %p358 = scmp.ne.s32.totalorder %s350, %s353
    %p359 = scmp.eq.s32.totalorder %s22, 0
    %p360 = por %p358, %p359
    %p361 = scmp.ne.s32.totalorder %s350, %s353
    %p362 = scmp.eq.s32.totalorder %s27, 1
    %p363 = por %p361, %p362
    %p364 = scmp.ne.s32.totalorder %s353, %s354
    %p365 = scmp.eq.s32.totalorder %s27, 0
    %p366 = por %p364, %p365
    %p367 = scmp.ne.s32.totalorder %s353, %s354
    %p368 = scmp.eq.s32.totalorder %s28, 1
    %p369 = por %p367, %p368
    %p371 = scmp.ne.s32.totalorder %s354, %s370
    %p372 = scmp.eq.s32.totalorder %s28, 0
    %p373 = por %p371, %p372
    %s374 = ssub.s32 %s22, %s29
    %p375 = scmp.eq.s32.totalorder %s374, 0
    %s377 = sadd.s32 %s376, 1
    %s378 = scalar_select %p375, %s376, %s377
    %p381 = pneg %p375
    %p382 = scmp.eq.s32.totalorder %s22, 1
    %p383 = por %p381, %p382
    %p384 = scmp.ne.s32.totalorder %s376, %s379
    %p385 = scmp.eq.s32.totalorder %s22, 0
    %p386 = por %p384, %p385
    %p387 = scmp.ne.s32.totalorder %s376, %s379
    %p388 = scmp.eq.s32.totalorder %s27, 1
    %p389 = por %p387, %p388
    %p390 = scmp.ne.s32.totalorder %s379, %s380
    %p391 = scmp.eq.s32.totalorder %s27, 0
    %p392 = por %p390, %p391
    %p393 = scmp.ne.s32.totalorder %s379, %s380
    %p394 = scmp.eq.s32.totalorder %s28, 1
    %p395 = por %p393, %p394
    %p397 = scmp.ne.s32.totalorder %s380, %s396
    %p398 = scmp.eq.s32.totalorder %s28, 0
    %p399 = por %p397, %p398
    %s400 = ssub.s32 %s22, %s29
    %p401 = scmp.eq.s32.totalorder %s400, 0
    %s403 = sadd.s32 %s402, 1
    %s404 = scalar_select %p401, %s402, %s403
    %p407 = pneg %p401
    %p408 = scmp.eq.s32.totalorder %s22, 1
    %p409 = por %p407, %p408
    %p410 = scmp.ne.s32.totalorder %s402, %s405
    %p411 = scmp.eq.s32.totalorder %s22, 0
    %p412 = por %p410, %p411
    %p413 = scmp.ne.s32.totalorder %s402, %s405
    %p414 = scmp.eq.s32.totalorder %s27, 1
    %p415 = por %p413, %p414
    %p416 = scmp.ne.s32.totalorder %s405, %s406
    %p417 = scmp.eq.s32.totalorder %s27, 0
    %p418 = por %p416, %p417
    %p419 = scmp.ne.s32.totalorder %s405, %s406
    %p420 = scmp.eq.s32.totalorder %s28, 1
    %p421 = por %p419, %p420
    %p423 = scmp.ne.s32.totalorder %s406, %s422
    %p424 = scmp.eq.s32.totalorder %s28, 0
    %p425 = por %p423, %p424
    %s427 = sadd.s32 %s426, 1
    %p430 = scmp.eq.s32.totalorder %s22, 1
    %p431 = scmp.ne.s32.totalorder %s426, %s428
    %p432 = scmp.eq.s32.totalorder %s22, 0
    %p433 = por %p431, %p432
    %p434 = scmp.ne.s32.totalorder %s426, %s428
    %p435 = scmp.eq.s32.totalorder %s27, 1
    %p436 = por %p434, %p435
    %p437 = scmp.ne.s32.totalorder %s428, %s429
    %p438 = scmp.eq.s32.totalorder %s27, 0
    %p439 = por %p437, %p438
    %p440 = scmp.ne.s32.totalorder %s428, %s429
    %p441 = scmp.eq.s32.totalorder %s28, 1
    %p442 = por %p440, %p441
    %p444 = scmp.ne.s32.totalorder %s429, %s443
    %p445 = scmp.eq.s32.totalorder %s28, 0
    %p446 = por %p444, %p445
    %p447 = scmp.le.s32.totalorder 1, %s22
    %p448 = scmp.lt.s32.totalorder %s22, 3
    %p449 = pnand %p447, %p448
    %p450 = pneg %p449
    // Predicated region
    $region9: #{_lambda_.2} parent=5 // pred_check
      _
    $region10: #{_lambda_.2} parent=5 // pred_check_branch
      %452 = sbr.rel (%p449) target = $region12
    $region11: #{_lambda_.2} parent=5 // pred_region
      %s453 = ssub.s32 %s22, 1
      // Predicated region
      $region13: #{_lambda_.2} parent=11 // pred_check
        %p454 = pneg %p43
      $region14: #{_lambda_.2} parent=11 // pred_check_branch
        %456 = sbr.rel (%p454) target = $region16
      $region15: #{_lambda_.2} parent=11 // pred_region
        _
      $region16: #{_lambda_.2} parent=11 // pred_fallthru
        _
      // Predicated region
      $region17: #{_lambda_.2} parent=11 // pred_check
        %p457 = pneg %p64
      $region18: #{_lambda_.2} parent=11 // pred_check_branch
        %459 = sbr.rel (%p457) target = $region20
      $region19: #{_lambda_.2} parent=11 // pred_region
        _
      $region20: #{_lambda_.2} parent=11 // pred_fallthru
        _
      // Predicated region
      $region21: #{_lambda_.2} parent=11 // pred_check
        %p460 = pneg %p85
      $region22: #{_lambda_.2} parent=11 // pred_check_branch
        %462 = sbr.rel (%p460) target = $region24
      $region23: #{_lambda_.2} parent=11 // pred_region
        _
      $region24: #{_lambda_.2} parent=11 // pred_fallthru
        _
      // Predicated region
      $region25: #{_lambda_.2} parent=11 // pred_check
        %p463 = pneg %p106
      $region26: #{_lambda_.2} parent=11 // pred_check_branch
        %465 = sbr.rel (%p463) target = $region28
      $region27: #{_lambda_.2} parent=11 // pred_region
        _
      $region28: #{_lambda_.2} parent=11 // pred_fallthru
        _
    $region12: #{_lambda_.2} parent=5 // pred_fallthru
      _
    %p466 = scmp.lt.s32.totalorder %s22, 2
    // Predicated region
    $region29: #{_lambda_.2} parent=5 // pred_check
      %p467 = pneg %p466
    $region30: #{_lambda_.2} parent=5 // pred_check_branch
      %469 = sbr.rel (%p467) target = $region32
    $region31: #{_lambda_.2} parent=5 // pred_region
      // Predicated region
      $region33: #{_lambda_.2} parent=31 // pred_check
        %p470 = pneg %p126
      $region34: #{_lambda_.2} parent=31 // pred_check_branch
        %472 = sbr.rel (%p470) target = $region36
      $region35: #{_lambda_.2} parent=31 // pred_region
        %p473 = scmp.lt.s32.totalorder %s22, 1
        %s474 = scalar_select %p473, %s22, 1
        %s475 = smul.addr %s474, 4
        %s476 = smul.addr %s475, 8
        %s477 = scalar_lea.vmem %s4, %s476
      $region36: #{_lambda_.2} parent=31 // pred_fallthru
        _
      // Predicated region
      $region37: #{_lambda_.2} parent=31 // pred_check
        %p478 = pneg %p152
      $region38: #{_lambda_.2} parent=31 // pred_check_branch
        %480 = sbr.rel (%p478) target = $region40
      $region39: #{_lambda_.2} parent=31 // pred_region
        %p481 = scmp.lt.s32.totalorder %s22, 1
        %s482 = scalar_select %p481, %s22, 1
        %s483 = scalar_lea.vmem %s5, %s482
      $region40: #{_lambda_.2} parent=31 // pred_fallthru
        _
      // Predicated region
      $region41: #{_lambda_.2} parent=31 // pred_check
        %p484 = pneg %p178
      $region42: #{_lambda_.2} parent=31 // pred_check_branch
        %486 = sbr.rel (%p484) target = $region44
      $region43: #{_lambda_.2} parent=31 // pred_region
        %p487 = scmp.lt.s32.totalorder %s22, 1
        %s488 = scalar_select %p487, %s22, 1
        %s489 = smul.addr %s488, 4
        %s490 = smul.addr %s489, 8
        %s491 = scalar_lea.vmem %s6, %s490
      $region44: #{_lambda_.2} parent=31 // pred_fallthru
        _
      // Predicated region
      $region45: #{_lambda_.2} parent=31 // pred_check
        %p492 = pneg %p204
      $region46: #{_lambda_.2} parent=31 // pred_check_branch
        %494 = sbr.rel (%p492) target = $region48
      $region47: #{_lambda_.2} parent=31 // pred_region
        %p495 = scmp.lt.s32.totalorder %s22, 1
        %s496 = scalar_select %p495, %s22, 1
        %s497 = scalar_lea.vmem %s7, %s496
      $region48: #{_lambda_.2} parent=31 // pred_fallthru
        _
      // Predicated region
      $region49: #{_lambda_.2} parent=31 // pred_check
        %p498 = pneg %p230
      $region50: #{_lambda_.2} parent=31 // pred_check_branch
        %500 = sbr.rel (%p498) target = $region52
      $region51: #{_lambda_.2} parent=31 // pred_region
        %p501 = scmp.lt.s32.totalorder %s22, 1
        %s502 = scalar_select %p501, %s22, 1
        %s503 = scalar_lea.vmem %s8, %s502
      $region52: #{_lambda_.2} parent=31 // pred_fallthru
        _
      // Predicated region
      $region53: #{_lambda_.2} parent=31 // pred_check
        %p504 = pneg %p256
      $region54: #{_lambda_.2} parent=31 // pred_check_branch
        %506 = sbr.rel (%p504) target = $region56
      $region55: #{_lambda_.2} parent=31 // pred_region
        %p507 = scmp.lt.s32.totalorder %s22, 1
        %s508 = scalar_select %p507, %s22, 1
        %s509 = scalar_lea.vmem %s9, %s508
      $region56: #{_lambda_.2} parent=31 // pred_fallthru
        _
      // Predicated region
      $region57: #{_lambda_.2} parent=31 // pred_check
        %p510 = pneg %p282
      $region58: #{_lambda_.2} parent=31 // pred_check_branch
        %512 = sbr.rel (%p510) target = $region60
      $region59: #{_lambda_.2} parent=31 // pred_region
        %p513 = scmp.lt.s32.totalorder %s22, 1
        %s514 = scalar_select %p513, %s22, 1
        %s515 = smul.addr %s514, 4
        %s516 = smul.addr %s515, 8
        %s517 = scalar_lea.vmem %s10, %s516
      $region60: #{_lambda_.2} parent=31 // pred_fallthru
        _
      // Predicated region
      $region61: #{_lambda_.2} parent=31 // pred_check
        %p518 = pneg %p308
      $region62: #{_lambda_.2} parent=31 // pred_check_branch
        %520 = sbr.rel (%p518) target = $region64
      $region63: #{_lambda_.2} parent=31 // pred_region
        %p521 = scmp.lt.s32.totalorder %s22, 1
        %s522 = scalar_select %p521, %s22, 1
        %s523 = scalar_lea.vmem %s11, %s522
      $region64: #{_lambda_.2} parent=31 // pred_fallthru
        _
      // Predicated region
      $region65: #{_lambda_.2} parent=31 // pred_check
        %p524 = pneg %p334
      $region66: #{_lambda_.2} parent=31 // pred_check_branch
        %526 = sbr.rel (%p524) target = $region68
      $region67: #{_lambda_.2} parent=31 // pred_region
        %p527 = scmp.lt.s32.totalorder %s22, 1
        %s528 = scalar_select %p527, %s22, 1
        %s529 = smul.addr %s528, 8
        %s530 = smul.addr %s529, 8
        %s531 = scalar_lea.vmem %s12, %s530
      $region68: #{_lambda_.2} parent=31 // pred_fallthru
        _
      // Predicated region
      $region69: #{_lambda_.2} parent=31 // pred_check
        %p532 = pneg %p360
      $region70: #{_lambda_.2} parent=31 // pred_check_branch
        %534 = sbr.rel (%p532) target = $region72
      $region71: #{_lambda_.2} parent=31 // pred_region
        %p535 = scmp.lt.s32.totalorder %s22, 1
        %s536 = scalar_select %p535, %s22, 1
        %s537 = scalar_lea.vmem %s13, %s536
      $region72: #{_lambda_.2} parent=31 // pred_fallthru
        _
      // Predicated region
      $region73: #{_lambda_.2} parent=31 // pred_check
        %p538 = pneg %p386
      $region74: #{_lambda_.2} parent=31 // pred_check_branch
        %540 = sbr.rel (%p538) target = $region76
      $region75: #{_lambda_.2} parent=31 // pred_region
        %p541 = scmp.lt.s32.totalorder %s22, 1
        %s542 = scalar_select %p541, %s22, 1
        %s543 = scalar_lea.vmem %s14, %s542
      $region76: #{_lambda_.2} parent=31 // pred_fallthru
        _
      // Predicated region
      $region77: #{_lambda_.2} parent=31 // pred_check
        %p544 = pneg %p412
      $region78: #{_lambda_.2} parent=31 // pred_check_branch
        %546 = sbr.rel (%p544) target = $region80
      $region79: #{_lambda_.2} parent=31 // pred_region
        %p547 = scmp.lt.s32.totalorder %s22, 1
        %s548 = scalar_select %p547, %s22, 1
        %s549 = scalar_lea.vmem %s15, %s548
      $region80: #{_lambda_.2} parent=31 // pred_fallthru
        _
    $region32: #{_lambda_.2} parent=5 // pred_fallthru
      _
    %p550 = scmp.le.s32.totalorder 1, %s22
    %p551 = scmp.lt.s32.totalorder %s22, 3
    %p552 = pnand %p550, %p551
    %p553 = pneg %p552
    // Predicated region
    $region81: #{_lambda_.2} parent=5 // pred_check
      _
    $region82: #{_lambda_.2} parent=5 // pred_check_branch
      %555 = sbr.rel (%p552) target = $region84
    $region83: #{_lambda_.2} parent=5 // pred_region
      %s556 = ssub.s32 %s22, 1
      %p557 = pneg %p43
      %p558 = pneg %p40
      %p559 = pneg %p64
      %p560 = pneg %p61
      %p561 = pneg %p85
      %p562 = pneg %p82
      %p563 = pneg %p106
      %p564 = pneg %p103
      %p565 = scmp.lt.s32.totalorder %s27, 1
      %s566 = scalar_select %p565, %s27, 1
      %s567 = smul.addr %s566, 4
      %s568 = smul.addr %s567, 8
      %s569 = scalar_lea.vmem %s4, %s568
      %p570 = pneg %p132
      %p571 = pneg %p129
      %p572 = scmp.lt.s32.totalorder %s27, 1
      %s573 = scalar_select %p572, %s27, 1
      %s574 = scalar_lea.vmem %s5, %s573
      %p575 = pneg %p158
      %p576 = pneg %p155
      %p577 = scmp.lt.s32.totalorder %s27, 1
      %s578 = scalar_select %p577, %s27, 1
      %s579 = smul.addr %s578, 4
      %s580 = smul.addr %s579, 8
      %s581 = scalar_lea.vmem %s6, %s580
      %p582 = pneg %p184
      %p583 = pneg %p181
      %p584 = scmp.lt.s32.totalorder %s27, 1
      %s585 = scalar_select %p584, %s27, 1
      %s586 = scalar_lea.vmem %s7, %s585
      %p587 = pneg %p210
      %p588 = pneg %p207
      %p589 = scmp.lt.s32.totalorder %s27, 1
      %s590 = scalar_select %p589, %s27, 1
      %s591 = scalar_lea.vmem %s8, %s590
      %p592 = pneg %p236
      %p593 = pneg %p233
      %p594 = scmp.lt.s32.totalorder %s27, 1
      %s595 = scalar_select %p594, %s27, 1
      %s596 = scalar_lea.vmem %s9, %s595
      %p597 = pneg %p262
      %p598 = pneg %p259
      %p599 = scmp.lt.s32.totalorder %s27, 1
      %s600 = scalar_select %p599, %s27, 1
      %s601 = smul.addr %s600, 4
      %s602 = smul.addr %s601, 8
      %s603 = scalar_lea.vmem %s10, %s602
      %p604 = pneg %p288
      %p605 = pneg %p285
      %p606 = scmp.lt.s32.totalorder %s27, 1
      %s607 = scalar_select %p606, %s27, 1
      %s608 = scalar_lea.vmem %s11, %s607
      %p609 = pneg %p314
      %p610 = pneg %p311
      %p611 = scmp.lt.s32.totalorder %s27, 1
      %s612 = scalar_select %p611, %s27, 1
      %s613 = smul.addr %s612, 8
      %s614 = smul.addr %s613, 8
      %s615 = scalar_lea.vmem %s12, %s614
      %p616 = pneg %p340
      %p617 = pneg %p337
      %p618 = scmp.lt.s32.totalorder %s27, 1
      %s619 = scalar_select %p618, %s27, 1
      %s620 = scalar_lea.vmem %s13, %s619
      %p621 = pneg %p366
      %p622 = pneg %p363
      %p623 = scmp.lt.s32.totalorder %s27, 1
      %s624 = scalar_select %p623, %s27, 1
      %s625 = scalar_lea.vmem %s14, %s624
      %p626 = pneg %p392
      %p627 = pneg %p389
      %p628 = scmp.lt.s32.totalorder %s27, 1
      %s629 = scalar_select %p628, %s27, 1
      %s630 = scalar_lea.vmem %s15, %s629
      %p631 = pneg %p418
      %p632 = pneg %p415
      %p633 = pneg %p439
      %p634 = pneg %p436
      %p635 = scmp.lt.s32.totalorder %s27, 1
      %s636 = scalar_select %p635, %s27, 1
      %s637 = smul.addr %s636, 4
      %s638 = smul.addr %s637, 8
      %s639 = scalar_lea.vmem %s4, %s638
      %p640 = scmp.lt.s32.totalorder %s27, 1
      %s641 = scalar_select %p640, %s27, 1
      %s642 = scalar_lea.vmem %s5, %s641
      %p643 = scmp.lt.s32.totalorder %s27, 1
      %s644 = scalar_select %p643, %s27, 1
      %s645 = smul.addr %s644, 4
      %s646 = smul.addr %s645, 8
      %s647 = scalar_lea.vmem %s6, %s646
      %p648 = scmp.lt.s32.totalorder %s27, 1
      %s649 = scalar_select %p648, %s27, 1
      %s650 = scalar_lea.vmem %s7, %s649
      %p651 = scmp.lt.s32.totalorder %s27, 1
      %s652 = scalar_select %p651, %s27, 1
      %s653 = scalar_lea.vmem %s8, %s652
      %p654 = scmp.lt.s32.totalorder %s27, 1
      %s655 = scalar_select %p654, %s27, 1
      %s656 = scalar_lea.vmem %s9, %s655
      %p657 = scmp.lt.s32.totalorder %s27, 1
      %s658 = scalar_select %p657, %s27, 1
      %s659 = smul.addr %s658, 4
      %s660 = smul.addr %s659, 8
      %s661 = scalar_lea.vmem %s10, %s660
      %p662 = scmp.lt.s32.totalorder %s27, 1
      %s663 = scalar_select %p662, %s27, 1
      %s664 = scalar_lea.vmem %s11, %s663
      %p665 = scmp.lt.s32.totalorder %s27, 1
      %s666 = scalar_select %p665, %s27, 1
      %s667 = smul.addr %s666, 8
      %s668 = smul.addr %s667, 8
      %s669 = scalar_lea.vmem %s12, %s668
      %p670 = scmp.lt.s32.totalorder %s27, 1
      %s671 = scalar_select %p670, %s27, 1
      %s672 = scalar_lea.vmem %s13, %s671
      %p673 = scmp.lt.s32.totalorder %s27, 1
      %s674 = scalar_select %p673, %s27, 1
      %s675 = scalar_lea.vmem %s14, %s674
      %p676 = scmp.lt.s32.totalorder %s27, 1
      %s677 = scalar_select %p676, %s27, 1
      %s678 = scalar_lea.vmem %s15, %s677
      %p679 = scmp.eq.s32.totalorder %s27, 0
      // Predicated region
      $region85: #{_lambda_.2} parent=83 // pred_check
        %p680 = pneg %p679
      $region86: #{_lambda_.2} parent=83 // pred_check_branch
        %682 = sbr.rel (%p680) target = $region88
      $region87: #{_lambda_.2} parent=83 // pred_region
        %v683 = vld [vmem:[%s0] sm:$0xff]
        %v684 = vld [vmem:[%s0 + $0x8] sm:$0xff]
        %v685 = vld [vmem:[%s2] sm:$0x1]
        %v686 = vld [vmem:[%s3] sm:$0x1]
        %vm687 = vcmask 261120
        %v688 = vsel %vm687, %v683, 0.0
        %689 = vadd.xlane.f32.xlu0 %v688
        %v690 = vpop.xlane.xlu0 %689
        %v691 = vsel %vm687, %v684, 0.0
        %692 = vadd.xlane.f32.xlu0 %v691
        %v693 = vpop.xlane.xlu0 %692
        %v694 = vrcp.pop 32.0
        %v695 = vmul.f32 %v690, %v694
        %v696 = vmul.f32 %v693, %v694
        %v697 = vsub.f32 %v683, %v695
        %v698 = vsub.f32 %v684, %v696
        %v699 = vmul.f32 %v697, %v697
        %v700 = vmul.f32 %v698, %v698
        %v701 = vsel %vm687, %v699, 0.0
        %702 = vadd.xlane.f32.xlu0 %v701
        %v703 = vpop.xlane.xlu0 %702
        %v704 = vsel %vm687, %v700, 0.0
        %705 = vadd.xlane.f32.xlu0 %v704
        %v706 = vpop.xlane.xlu0 %705
        %v707 = vmul.f32 %v703, %v694
        %v708 = vmul.f32 %v706, %v694
        %v709 = vadd.f32 %v707, 1e-12
        %v710 = vadd.f32 %v708, 1e-12
        %v711 = vrsqrt.pop %v709
        %v712 = vrsqrt.pop %v710
        %v713 = vmul.f32 %v697, %v711
        %v714 = vmul.f32 %v698, %v712
        %v716 = vlaneseq
        %v717 = vshrl.u32 %v716, 7
        %v718 = vsub.s32 0, %v717
        %v719 = vrot.slane %v685, %v718
        %v721 = vmul.f32 %v713, %v719
        %v722 = vmul.f32 %v714, %v719
        %v724 = vlaneseq
        %v725 = vshrl.u32 %v724, 7
        %v726 = vsub.s32 0, %v725
        %v727 = vrot.slane %v686, %v726
        %v729 = vadd.f32 %v721, %v727
        %v730 = vadd.f32 %v722, %v727
        %731 = vst.msk [vmem:[%s16] sm:$0xff] %vm687, %v729
        %732 = vst.msk [vmem:[%s16 + $0x8] sm:$0xff] %vm687, %v730
      $region88: #{_lambda_.2} parent=83 // pred_fallthru
        _
      %v733 = vld [vmem:[%s16] sm:$0xff]
      %v734 = vld [vmem:[%s16 + $0x8] sm:$0xff]
      %v735 = vld [vmem:[%s639] sm:$0xff]
      %v736 = vld [vmem:[%s639 + $0x8] sm:$0xff]
      %v737 = vld [vmem:[%s639 + $0x10] sm:$0xff]
      %v738 = vld [vmem:[%s639 + $0x18] sm:$0xff]
      %v739 = vld [vmem:[%s642] sm:$0x1]
      %v741 = vlaneseq
      %v742 = vshrl.u32 %v741, 7
      %v743 = vsub.s32 0, %v742
      %v744 = vrot.slane %v739, %v743
      %vm746 = vcmask 261120
      %v748 = vsel %vm746, %v733, 0
      %v751 = vsel %vm746, %v734, 0
      %753 = vmatprep.subr.mxu0 0.0
      %754 = vmatpush1.msra.mxu0 %v735
      %755 = vmatprep.subr.mxu0 0.0
      %756 = vmatpush1.msra.mxu0 %v736
      %757 = vmatprep.subr.mxu0 0.0
      %758 = vmatpush1.msra.mxu0 %v737
      %759 = vmatprep.subr.mxu0 0.0
      %760 = vmatpush1.msra.mxu0 %v738
      %761 = vmatprep.subr.mxu0 0.0
      %762 = vmatpush1.msra.mxu0 0.0
      %763 = vmatprep.subr.mxu0 0.0
      %764 = vmatpush1.msra.mxu0 0.0
      %765 = vmatprep.subr.mxu0 0.0
      %766 = vmatpush1.msra.mxu0 0.0
      %767 = vmatprep.subr.mxu0 0.0
      %768 = vmatpush1.msra.mxu0 0.0
      %769 = vmatprep.subr.mxu0 0.0
      %770 = vmatpush1.msra.mxu0 0.0
      %771 = vmatprep.subr.mxu0 0.0
      %772 = vmatpush1.msra.mxu0 0.0
      %773 = vmatprep.subr.mxu0 0.0
      %774 = vmatpush1.msra.mxu0 0.0
      %775 = vmatprep.subr.mxu0 0.0
      %776 = vmatpush1.msra.mxu0 0.0
      %777 = vmatprep.subr.mxu0 0.0
      %778 = vmatpush1.msra.mxu0 0.0
      %779 = vmatprep.subr.mxu0 0.0
      %780 = vmatpush1.msra.mxu0 0.0
      %781 = vmatprep.subr.mxu0 0.0
      %782 = vmatpush1.msra.mxu0 0.0
      %783 = vmatprep.subr.mxu0 0.0
      %784 = vmatpush1.msra.mxu0 0.0
      %785 = vmatprep.subr.mxu0 0.0
      %786 = vmatpush1.msra.mxu0 0.0
      %787 = vmatprep.subr.mxu0 0.0
      %788 = vmatpush1.msra.mxu0 0.0
      %789 = vmatprep.subr.mxu0 0.0
      %790 = vmatpush1.msra.mxu0 0.0
      %791 = vmatprep.subr.mxu0 0.0
      %792 = vmatpush1.msra.mxu0 0.0
      %793 = vmatprep.subr.mxu0 0.0
      %794 = vmatpush1.msra.mxu0 0.0
      %795 = vmatprep.subr.mxu0 0.0
      %796 = vmatpush1.msra.mxu0 0.0
      %797 = vmatprep.subr.mxu0 0.0
      %798 = vmatpush1.msra.mxu0 0.0
      %799 = vmatprep.subr.mxu0 0.0
      %800 = vmatpush1.msra.mxu0 0.0
      %801 = vmatprep.subr.mxu0 0.0
      %802 = vmatpush1.msra.mxu0 0.0
      %803 = vmatprep.subr.mxu0 0.0
      %804 = vmatpush1.msra.mxu0 0.0
      %805 = vmatprep.subr.mxu0 0.0
      %806 = vmatpush1.msra.mxu0 0.0
      %807 = vmatprep.subr.mxu0 0.0
      %808 = vmatpush1.msra.mxu0 0.0
      %809 = vmatprep.subr.mxu0 0.0
      %810 = vmatpush1.msra.mxu0 0.0
      %811 = vmatprep.subr.mxu0 0.0
      %812 = vmatpush1.msra.mxu0 0.0
      %813 = vmatprep.subr.mxu0 0.0
      %814 = vmatpush1.msra.mxu0 0.0
      %815 = vmatprep.subr.mxu0 0.0
      %816 = vmatpush1.msra.mxu0 0.0
      %817 = vmatprep.mubr.f32.mxu0 0.0
      %818 = vmatmul.mubr.f32.gmra.mrb[0].mxu0 %v748
      %v819 = vpop.f32.mrb[0].mxu0
      %v820 = vadd.f32 %v744, %v819
      %v821 = vpop.f32.mrb[0].mxu0
      %822 = vmatprep.mubr.f32.mxu0 0.0
      %823 = vmatmul.mubr.f32.gmra.mrb[0].mxu0 %v751
      %v824 = vpop.f32.mrb[0].mxu0
      %v825 = vadd.f32 %v744, %v824
      %v826 = vpop.f32.mrb[0].mxu0
      %827 = vdwg.mxu0
      %v828 = vld [vmem:[%s1] sm:$0x3]
      %v831 = vunpack.c.l.s4 1966171168
      %v832 = vunpack.c.0.s8 %v831
      %v833 = vlaneseq
      %v834 = vshrl.u32 %v833, 7
      %v835 = vsub.s32 %v832, %v834
      %v836 = vrot.slane %v828, %v835
      %v837 = vcombine.high %v836, %v836
      %v839 = vunpack.c.l.s4 1966171168
      %v840 = vunpack.c.0.s8 %v839
      %v841 = vlaneseq
      %v842 = vshrl.u32 %v841, 7
      %v843 = vsub.s32 %v840, %v842
      %v844 = vrot.slane %v836, %v843
      %v846 = vunpack.c.l.s4 1966171168
      %v847 = vunpack.c.0.s8 %v846
      %v848 = vlaneseq
      %v849 = vshrl.u32 %v848, 7
      %v850 = vsub.s32 %v847, %v849
      %v851 = vrot.slane %v837, %v850
      %853 = vrot.lane.b32.xlu0 %v820, 96
      %v854 = vpop.permute.xlu0 %853
      %vm855 = vcmask 130048
      %v856 = vsel %vm855, %v820, 0
      %v858 = vsel %vm855, %v854, 0
      %860 = vmatprep.subr.mxu0 0.0
      %861 = vmatpush1.xpose.msra.mxu0 %v858
      %862 = vmatprep.subr.mxu0 0.0
      %863 = vmatpush1.xpose.msra.mxu0 0.0
      %864 = vmatprep.subr.mxu0 0.0
      %865 = vmatpush1.xpose.msra.mxu0 0.0
      %866 = vmatprep.subr.mxu0 0.0
      %867 = vmatpush1.xpose.msra.mxu0 0.0
      %868 = vmatprep.subr.mxu0 0.0
      %869 = vmatpush1.xpose.msra.mxu0 0.0
      %870 = vmatprep.subr.mxu0 0.0
      %871 = vmatpush1.xpose.msra.mxu0 0.0
      %872 = vmatprep.subr.mxu0 0.0
      %873 = vmatpush1.xpose.msra.mxu0 0.0
      %874 = vmatprep.subr.mxu0 0.0
      %875 = vmatpush1.xpose.msra.mxu0 0.0
      %876 = vmatprep.subr.mxu0 0.0
      %877 = vmatpush1.xpose.msra.mxu0 0.0
      %878 = vmatprep.subr.mxu0 0.0
      %879 = vmatpush1.xpose.msra.mxu0 0.0
      %880 = vmatprep.subr.mxu0 0.0
      %881 = vmatpush1.xpose.msra.mxu0 0.0
      %882 = vmatprep.subr.mxu0 0.0
      %883 = vmatpush1.xpose.msra.mxu0 0.0
      %884 = vmatprep.subr.mxu0 0.0
      %885 = vmatpush1.xpose.msra.mxu0 0.0
      %886 = vmatprep.subr.mxu0 0.0
      %887 = vmatpush1.xpose.msra.mxu0 0.0
      %888 = vmatprep.subr.mxu0 0.0
      %889 = vmatpush1.xpose.msra.mxu0 0.0
      %890 = vmatprep.subr.mxu0 0.0
      %891 = vmatpush1.xpose.msra.mxu0 0.0
      %892 = vmatprep.subr.mxu0 0.0
      %893 = vmatpush1.xpose.msra.mxu0 0.0
      %894 = vmatprep.subr.mxu0 0.0
      %895 = vmatpush1.xpose.msra.mxu0 0.0
      %896 = vmatprep.subr.mxu0 0.0
      %897 = vmatpush1.xpose.msra.mxu0 0.0
      %898 = vmatprep.subr.mxu0 0.0
      %899 = vmatpush1.xpose.msra.mxu0 0.0
      %900 = vmatprep.subr.mxu0 0.0
      %901 = vmatpush1.xpose.msra.mxu0 0.0
      %902 = vmatprep.subr.mxu0 0.0
      %903 = vmatpush1.xpose.msra.mxu0 0.0
      %904 = vmatprep.subr.mxu0 0.0
      %905 = vmatpush1.xpose.msra.mxu0 0.0
      %906 = vmatprep.subr.mxu0 0.0
      %907 = vmatpush1.xpose.msra.mxu0 0.0
      %908 = vmatprep.subr.mxu0 0.0
      %909 = vmatpush1.xpose.msra.mxu0 0.0
      %910 = vmatprep.subr.mxu0 0.0
      %911 = vmatpush1.xpose.msra.mxu0 0.0
      %912 = vmatprep.subr.mxu0 0.0
      %913 = vmatpush1.xpose.msra.mxu0 0.0
      %914 = vmatprep.subr.mxu0 0.0
      %915 = vmatpush1.xpose.msra.mxu0 0.0
      %916 = vmatprep.subr.mxu0 0.0
      %917 = vmatpush1.xpose.msra.mxu0 0.0
      %918 = vmatprep.subr.mxu0 0.0
      %919 = vmatpush1.xpose.msra.mxu0 0.0
      %920 = vmatprep.subr.mxu0 0.0
      %921 = vmatpush1.xpose.msra.mxu0 0.0
      %922 = vmatprep.subr.mxu0 0.0
      %923 = vmatpush1.xpose.msra.mxu0 0.0
      %924 = vmatprep.mubr.f32.mxu0 0.0
      %925 = vmatmul.mubr.f32.gmra.mrb[0].mxu0 %v856
      %v926 = vpop.f32.mrb[0].mxu0
      %v927 = vadd.f32 0.0, %v926
      %v928 = vpop.f32.mrb[0].mxu0
      %929 = vdwg.mxu0
      %931 = vrot.lane.b32.xlu0 %v825, 96
      %v932 = vpop.permute.xlu0 %931
      %v933 = vsel %vm855, %v825, 0
      %v935 = vsel %vm855, %v932, 0
      %937 = vmatprep.subr.mxu0 0.0
      %938 = vmatpush1.xpose.msra.mxu0 %v935
      %939 = vmatprep.subr.mxu0 0.0
      %940 = vmatpush1.xpose.msra.mxu0 0.0
      %941 = vmatprep.subr.mxu0 0.0
      %942 = vmatpush1.xpose.msra.mxu0 0.0
      %943 = vmatprep.subr.mxu0 0.0
      %944 = vmatpush1.xpose.msra.mxu0 0.0
      %945 = vmatprep.subr.mxu0 0.0
      %946 = vmatpush1.xpose.msra.mxu0 0.0
      %947 = vmatprep.subr.mxu0 0.0
      %948 = vmatpush1.xpose.msra.mxu0 0.0
      %949 = vmatprep.subr.mxu0 0.0
      %950 = vmatpush1.xpose.msra.mxu0 0.0
      %951 = vmatprep.subr.mxu0 0.0
      %952 = vmatpush1.xpose.msra.mxu0 0.0
      %953 = vmatprep.subr.mxu0 0.0
      %954 = vmatpush1.xpose.msra.mxu0 0.0
      %955 = vmatprep.subr.mxu0 0.0
      %956 = vmatpush1.xpose.msra.mxu0 0.0
      %957 = vmatprep.subr.mxu0 0.0
      %958 = vmatpush1.xpose.msra.mxu0 0.0
      %959 = vmatprep.subr.mxu0 0.0
      %960 = vmatpush1.xpose.msra.mxu0 0.0
      %961 = vmatprep.subr.mxu0 0.0
      %962 = vmatpush1.xpose.msra.mxu0 0.0
      %963 = vmatprep.subr.mxu0 0.0
      %964 = vmatpush1.xpose.msra.mxu0 0.0
      %965 = vmatprep.subr.mxu0 0.0
      %966 = vmatpush1.xpose.msra.mxu0 0.0
      %967 = vmatprep.subr.mxu0 0.0
      %968 = vmatpush1.xpose.msra.mxu0 0.0
      %969 = vmatprep.subr.mxu0 0.0
      %970 = vmatpush1.xpose.msra.mxu0 0.0
      %971 = vmatprep.subr.mxu0 0.0
      %972 = vmatpush1.xpose.msra.mxu0 0.0
      %973 = vmatprep.subr.mxu0 0.0
      %974 = vmatpush1.xpose.msra.mxu0 0.0
      %975 = vmatprep.subr.mxu0 0.0
      %976 = vmatpush1.xpose.msra.mxu0 0.0
      %977 = vmatprep.subr.mxu0 0.0
      %978 = vmatpush1.xpose.msra.mxu0 0.0
      %979 = vmatprep.subr.mxu0 0.0
      %980 = vmatpush1.xpose.msra.mxu0 0.0
      %981 = vmatprep.subr.mxu0 0.0
      %982 = vmatpush1.xpose.msra.mxu0 0.0
      %983 = vmatprep.subr.mxu0 0.0
      %984 = vmatpush1.xpose.msra.mxu0 0.0
      %985 = vmatprep.subr.mxu0 0.0
      %986 = vmatpush1.xpose.msra.mxu0 0.0
      %987 = vmatprep.subr.mxu0 0.0
      %988 = vmatpush1.xpose.msra.mxu0 0.0
      %989 = vmatprep.subr.mxu0 0.0
      %990 = vmatpush1.xpose.msra.mxu0 0.0
      %991 = vmatprep.subr.mxu0 0.0
      %992 = vmatpush1.xpose.msra.mxu0 0.0
      %993 = vmatprep.subr.mxu0 0.0
      %994 = vmatpush1.xpose.msra.mxu0 0.0
      %995 = vmatprep.subr.mxu0 0.0
      %996 = vmatpush1.xpose.msra.mxu0 0.0
      %997 = vmatprep.subr.mxu0 0.0
      %998 = vmatpush1.xpose.msra.mxu0 0.0
      %999 = vmatprep.subr.mxu0 0.0
      %1000 = vmatpush1.xpose.msra.mxu0 0.0
      %1001 = vmatprep.mubr.f32.mxu0 0.0
      %1002 = vmatmul.mubr.f32.gmra.mrb[0].mxu0 %v933
      %v1003 = vpop.f32.mrb[0].mxu0
      %v1004 = vadd.f32 0.0, %v1003
      %v1005 = vpop.f32.mrb[0].mxu0
      %1006 = vdwg.mxu0
      %v1007 = vmul.f32 %v927, 0.25
      %v1008 = vmul.f32 %v1004, 0.25
      %v1009 = vlaneseq
      %v1010 = vshrl.u32 %v1009, 7
      %v1011 = vsub.s32 0, %v1010
      %v1012 = vrot.slane %v844, %v1011
      %v1013 = vlaneseq
      %v1014 = vshrl.u32 %v1013, 7
      %v1015 = vsub.s32 0, %v1014
      %v1016 = vrot.slane %v851, %v1015
      %v1019 = vadd.f32 %v1007, %v1012
      %v1020 = vadd.f32 %v1008, %v1016
      %vm1021 = vcmask 64512
      %v1022 = vsel %vm1021, %v1019, -inf
      %1023 = vmax.xlane.f32.xlu0 %v1022
      %v1024 = vpop.xlane.xlu0 %1023
      %v1025 = vsel %vm1021, %v1020, -inf
      %1026 = vmax.xlane.f32.xlu0 %v1025
      %v1027 = vpop.xlane.xlu0 %1026
      %v1028 = vsub.f32 %v1019, %v1024
      %v1029 = vsub.f32 %v1020, %v1027
      %v1030 = vmul.f32 %v1028, 1.442695
      %v1031 = vpow.pop %v1030
      %v1032 = vmul.f32 %v1029, 1.442695
      %v1033 = vpow.pop %v1032
      %v1034 = vsel %vm1021, %v1031, 0.0
      %1035 = vadd.xlane.f32.xlu0 %v1034
      %v1036 = vpop.xlane.xlu0 %1035
      %v1037 = vsel %vm1021, %v1033, 0.0
      %1038 = vadd.xlane.f32.xlu0 %v1037
      %v1039 = vpop.xlane.xlu0 %1038
      %v1040 = vrcp.pop %v1036
      %v1041 = vrcp.pop %v1039
      %v1042 = vmul.f32 %v1031, %v1040
      %v1043 = vmul.f32 %v1033, %v1041
      %1044 = vrot.lane.b32.xlu0 %v820, 64
      %v1045 = vpop.permute.xlu0 %1044
      %v1048 = vsel %vm1021, %v1042, 0
      %1050 = vmatprep.subr.mxu0 0.0
      %1051 = vmatpush1.msra.mxu0 %v1045
      %1052 = vmatprep.subr.mxu0 0.0
      %1053 = vmatpush1.msra.mxu0 0.0
      %1054 = vmatprep.subr.mxu0 0.0
      %1055 = vmatpush1.msra.mxu0 0.0
      %1056 = vmatprep.subr.mxu0 0.0
      %1057 = vmatpush1.msra.mxu0 0.0
      %1058 = vmatprep.subr.mxu0 0.0
      %1059 = vmatpush1.msra.mxu0 0.0
      %1060 = vmatprep.subr.mxu0 0.0
      %1061 = vmatpush1.msra.mxu0 0.0
      %1062 = vmatprep.subr.mxu0 0.0
      %1063 = vmatpush1.msra.mxu0 0.0
      %1064 = vmatprep.subr.mxu0 0.0
      %1065 = vmatpush1.msra.mxu0 0.0
      %1066 = vmatprep.subr.mxu0 0.0
      %1067 = vmatpush1.msra.mxu0 0.0
      %1068 = vmatprep.subr.mxu0 0.0
      %1069 = vmatpush1.msra.mxu0 0.0
      %1070 = vmatprep.subr.mxu0 0.0
      %1071 = vmatpush1.msra.mxu0 0.0
      %1072 = vmatprep.subr.mxu0 0.0
      %1073 = vmatpush1.msra.mxu0 0.0
      %1074 = vmatprep.subr.mxu0 0.0
      %1075 = vmatpush1.msra.mxu0 0.0
      %1076 = vmatprep.subr.mxu0 0.0
      %1077 = vmatpush1.msra.mxu0 0.0
      %1078 = vmatprep.subr.mxu0 0.0
      %1079 = vmatpush1.msra.mxu0 0.0
      %1080 = vmatprep.subr.mxu0 0.0
      %1081 = vmatpush1.msra.mxu0 0.0
      %1082 = vmatprep.subr.mxu0 0.0
      %1083 = vmatpush1.msra.mxu0 0.0
      %1084 = vmatprep.subr.mxu0 0.0
      %1085 = vmatpush1.msra.mxu0 0.0
      %1086 = vmatprep.subr.mxu0 0.0
      %1087 = vmatpush1.msra.mxu0 0.0
      %1088 = vmatprep.subr.mxu0 0.0
      %1089 = vmatpush1.msra.mxu0 0.0
      %1090 = vmatprep.subr.mxu0 0.0
      %1091 = vmatpush1.msra.mxu0 0.0
      %1092 = vmatprep.subr.mxu0 0.0
      %1093 = vmatpush1.msra.mxu0 0.0
      %1094 = vmatprep.subr.mxu0 0.0
      %1095 = vmatpush1.msra.mxu0 0.0
      %1096 = vmatprep.subr.mxu0 0.0
      %1097 = vmatpush1.msra.mxu0 0.0
      %1098 = vmatprep.subr.mxu0 0.0
      %1099 = vmatpush1.msra.mxu0 0.0
      %1100 = vmatprep.subr.mxu0 0.0
      %1101 = vmatpush1.msra.mxu0 0.0
      %1102 = vmatprep.subr.mxu0 0.0
      %1103 = vmatpush1.msra.mxu0 0.0
      %1104 = vmatprep.subr.mxu0 0.0
      %1105 = vmatpush1.msra.mxu0 0.0
      %1106 = vmatprep.subr.mxu0 0.0
      %1107 = vmatpush1.msra.mxu0 0.0
      %1108 = vmatprep.subr.mxu0 0.0
      %1109 = vmatpush1.msra.mxu0 0.0
      %1110 = vmatprep.subr.mxu0 0.0
      %1111 = vmatpush1.msra.mxu0 0.0
      %1112 = vmatprep.subr.mxu0 0.0
      %1113 = vmatpush1.msra.mxu0 0.0
      %1114 = vmatprep.mubr.f32.mxu0 0.0
      %1115 = vmatmul.mubr.f32.gmra.mrb[0].mxu0 %v1048
      %v1116 = vpop.f32.mrb[0].mxu0
      %v1117 = vadd.f32 0.0, %v1116
      %v1118 = vpop.f32.mrb[0].mxu0
      %1119 = vdwg.mxu0
      %1120 = vrot.lane.b32.xlu0 %v825, 64
      %v1121 = vpop.permute.xlu0 %1120
      %v1124 = vsel %vm1021, %v1043, 0
      %1126 = vmatprep.subr.mxu0 0.0
      %1127 = vmatpush1.msra.mxu0 %v1121
      %1128 = vmatprep.subr.mxu0 0.0
      %1129 = vmatpush1.msra.mxu0 0.0
      %1130 = vmatprep.subr.mxu0 0.0
      %1131 = vmatpush1.msra.mxu0 0.0
      %1132 = vmatprep.subr.mxu0 0.0
      %1133 = vmatpush1.msra.mxu0 0.0
      %1134 = vmatprep.subr.mxu0 0.0
      %1135 = vmatpush1.msra.mxu0 0.0
      %1136 = vmatprep.subr.mxu0 0.0
      %1137 = vmatpush1.msra.mxu0 0.0
      %1138 = vmatprep.subr.mxu0 0.0
      %1139 = vmatpush1.msra.mxu0 0.0
      %1140 = vmatprep.subr.mxu0 0.0
      %1141 = vmatpush1.msra.mxu0 0.0
      %1142 = vmatprep.subr.mxu0 0.0
      %1143 = vmatpush1.msra.mxu0 0.0
      %1144 = vmatprep.subr.mxu0 0.0
      %1145 = vmatpush1.msra.mxu0 0.0
      %1146 = vmatprep.subr.mxu0 0.0
      %1147 = vmatpush1.msra.mxu0 0.0
      %1148 = vmatprep.subr.mxu0 0.0
      %1149 = vmatpush1.msra.mxu0 0.0
      %1150 = vmatprep.subr.mxu0 0.0
      %1151 = vmatpush1.msra.mxu0 0.0
      %1152 = vmatprep.subr.mxu0 0.0
      %1153 = vmatpush1.msra.mxu0 0.0
      %1154 = vmatprep.subr.mxu0 0.0
      %1155 = vmatpush1.msra.mxu0 0.0
      %1156 = vmatprep.subr.mxu0 0.0
      %1157 = vmatpush1.msra.mxu0 0.0
      %1158 = vmatprep.subr.mxu0 0.0
      %1159 = vmatpush1.msra.mxu0 0.0
      %1160 = vmatprep.subr.mxu0 0.0
      %1161 = vmatpush1.msra.mxu0 0.0
      %1162 = vmatprep.subr.mxu0 0.0
      %1163 = vmatpush1.msra.mxu0 0.0
      %1164 = vmatprep.subr.mxu0 0.0
      %1165 = vmatpush1.msra.mxu0 0.0
      %1166 = vmatprep.subr.mxu0 0.0
      %1167 = vmatpush1.msra.mxu0 0.0
      %1168 = vmatprep.subr.mxu0 0.0
      %1169 = vmatpush1.msra.mxu0 0.0
      %1170 = vmatprep.subr.mxu0 0.0
      %1171 = vmatpush1.msra.mxu0 0.0
      %1172 = vmatprep.subr.mxu0 0.0
      %1173 = vmatpush1.msra.mxu0 0.0
      %1174 = vmatprep.subr.mxu0 0.0
      %1175 = vmatpush1.msra.mxu0 0.0
      %1176 = vmatprep.subr.mxu0 0.0
      %1177 = vmatpush1.msra.mxu0 0.0
      %1178 = vmatprep.subr.mxu0 0.0
      %1179 = vmatpush1.msra.mxu0 0.0
      %1180 = vmatprep.subr.mxu0 0.0
      %1181 = vmatpush1.msra.mxu0 0.0
      %1182 = vmatprep.subr.mxu0 0.0
      %1183 = vmatpush1.msra.mxu0 0.0
      %1184 = vmatprep.subr.mxu0 0.0
      %1185 = vmatpush1.msra.mxu0 0.0
      %1186 = vmatprep.subr.mxu0 0.0
      %1187 = vmatpush1.msra.mxu0 0.0
      %1188 = vmatprep.subr.mxu0 0.0
      %1189 = vmatpush1.msra.mxu0 0.0
      %1190 = vmatprep.mubr.f32.mxu0 0.0
      %1191 = vmatmul.mubr.f32.gmra.mrb[0].mxu0 %v1124
      %v1192 = vpop.f32.mrb[0].mxu0
      %v1193 = vadd.f32 0.0, %v1192
      %v1194 = vpop.f32.mrb[0].mxu0
      %1195 = vdwg.mxu0
      %1196 = vrot.lane.b32.xlu0 %v820, 112
      %v1197 = vpop.permute.xlu0 %1196
      %1198 = vrot.lane.b32.xlu0 %v820, 80
      %v1199 = vpop.permute.xlu0 %1198
      %v1200 = vsel %vm855, %v1197, 0
      %v1202 = vsel %vm855, %v1199, 0
      %1204 = vmatprep.subr.mxu0 0.0
      %1205 = vmatpush1.xpose.msra.mxu0 %v1202
      %1206 = vmatprep.subr.mxu0 0.0
      %1207 = vmatpush1.xpose.msra.mxu0 0.0
      %1208 = vmatprep.subr.mxu0 0.0
      %1209 = vmatpush1.xpose.msra.mxu0 0.0
      %1210 = vmatprep.subr.mxu0 0.0
      %1211 = vmatpush1.xpose.msra.mxu0 0.0
      %1212 = vmatprep.subr.mxu0 0.0
      %1213 = vmatpush1.xpose.msra.mxu0 0.0
      %1214 = vmatprep.subr.mxu0 0.0
      %1215 = vmatpush1.xpose.msra.mxu0 0.0
      %1216 = vmatprep.subr.mxu0 0.0
      %1217 = vmatpush1.xpose.msra.mxu0 0.0
      %1218 = vmatprep.subr.mxu0 0.0
      %1219 = vmatpush1.xpose.msra.mxu0 0.0
      %1220 = vmatprep.subr.mxu0 0.0
      %1221 = vmatpush1.xpose.msra.mxu0 0.0
      %1222 = vmatprep.subr.mxu0 0.0
      %1223 = vmatpush1.xpose.msra.mxu0 0.0
      %1224 = vmatprep.subr.mxu0 0.0
      %1225 = vmatpush1.xpose.msra.mxu0 0.0
      %1226 = vmatprep.subr.mxu0 0.0
      %1227 = vmatpush1.xpose.msra.mxu0 0.0
      %1228 = vmatprep.subr.mxu0 0.0
      %1229 = vmatpush1.xpose.msra.mxu0 0.0
      %1230 = vmatprep.subr.mxu0 0.0
      %1231 = vmatpush1.xpose.msra.mxu0 0.0
      %1232 = vmatprep.subr.mxu0 0.0
      %1233 = vmatpush1.xpose.msra.mxu0 0.0
      %1234 = vmatprep.subr.mxu0 0.0
      %1235 = vmatpush1.xpose.msra.mxu0 0.0
      %1236 = vmatprep.subr.mxu0 0.0
      %1237 = vmatpush1.xpose.msra.mxu0 0.0
      %1238 = vmatprep.subr.mxu0 0.0
      %1239 = vmatpush1.xpose.msra.mxu0 0.0
      %1240 = vmatprep.subr.mxu0 0.0
      %1241 = vmatpush1.xpose.msra.mxu0 0.0
      %1242 = vmatprep.subr.mxu0 0.0
      %1243 = vmatpush1.xpose.msra.mxu0 0.0
      %1244 = vmatprep.subr.mxu0 0.0
      %1245 = vmatpush1.xpose.msra.mxu0 0.0
      %1246 = vmatprep.subr.mxu0 0.0
      %1247 = vmatpush1.xpose.msra.mxu0 0.0
      %1248 = vmatprep.subr.mxu0 0.0
      %1249 = vmatpush1.xpose.msra.mxu0 0.0
      %1250 = vmatprep.subr.mxu0 0.0
      %1251 = vmatpush1.xpose.msra.mxu0 0.0
      %1252 = vmatprep.subr.mxu0 0.0
      %1253 = vmatpush1.xpose.msra.mxu0 0.0
      %1254 = vmatprep.subr.mxu0 0.0
      %1255 = vmatpush1.xpose.msra.mxu0 0.0
      %1256 = vmatprep.subr.mxu0 0.0
      %1257 = vmatpush1.xpose.msra.mxu0 0.0
      %1258 = vmatprep.subr.mxu0 0.0
      %1259 = vmatpush1.xpose.msra.mxu0 0.0
      %1260 = vmatprep.subr.mxu0 0.0
      %1261 = vmatpush1.xpose.msra.mxu0 0.0
      %1262 = vmatprep.subr.mxu0 0.0
      %1263 = vmatpush1.xpose.msra.mxu0 0.0
      %1264 = vmatprep.subr.mxu0 0.0
      %1265 = vmatpush1.xpose.msra.mxu0 0.0
      %1266 = vmatprep.subr.mxu0 0.0
      %1267 = vmatpush1.xpose.msra.mxu0 0.0
      %1268 = vmatprep.mubr.f32.mxu0 0.0
      %1269 = vmatmul.mubr.f32.gmra.mrb[0].mxu0 %v1200
      %v1270 = vpop.f32.mrb[0].mxu0
      %v1271 = vadd.f32 0.0, %v1270
      %v1272 = vpop.f32.mrb[0].mxu0
      %1273 = vdwg.mxu0
      %1274 = vrot.lane.b32.xlu0 %v825, 112
      %v1275 = vpop.permute.xlu0 %1274
      %1276 = vrot.lane.b32.xlu0 %v825, 80
      %v1277 = vpop.permute.xlu0 %1276
      %v1278 = vsel %vm855, %v1275, 0
      %v1280 = vsel %vm855, %v1277, 0
      %1282 = vmatprep.subr.mxu0 0.0
      %1283 = vmatpush1.xpose.msra.mxu0 %v1280
      %1284 = vmatprep.subr.mxu0 0.0
      %1285 = vmatpush1.xpose.msra.mxu0 0.0
      %1286 = vmatprep.subr.mxu0 0.0
      %1287 = vmatpush1.xpose.msra.mxu0 0.0
      %1288 = vmatprep.subr.mxu0 0.0
      %1289 = vmatpush1.xpose.msra.mxu0 0.0
      %1290 = vmatprep.subr.mxu0 0.0
      %1291 = vmatpush1.xpose.msra.mxu0 0.0
      %1292 = vmatprep.subr.mxu0 0.0
      %1293 = vmatpush1.xpose.msra.mxu0 0.0
      %1294 = vmatprep.subr.mxu0 0.0
      %1295 = vmatpush1.xpose.msra.mxu0 0.0
      %1296 = vmatprep.subr.mxu0 0.0
      %1297 = vmatpush1.xpose.msra.mxu0 0.0
      %1298 = vmatprep.subr.mxu0 0.0
      %1299 = vmatpush1.xpose.msra.mxu0 0.0
      %1300 = vmatprep.subr.mxu0 0.0
      %1301 = vmatpush1.xpose.msra.mxu0 0.0
      %1302 = vmatprep.subr.mxu0 0.0
      %1303 = vmatpush1.xpose.msra.mxu0 0.0
      %1304 = vmatprep.subr.mxu0 0.0
      %1305 = vmatpush1.xpose.msra.mxu0 0.0
      %1306 = vmatprep.subr.mxu0 0.0
      %1307 = vmatpush1.xpose.msra.mxu0 0.0
      %1308 = vmatprep.subr.mxu0 0.0
      %1309 = vmatpush1.xpose.msra.mxu0 0.0
      %1310 = vmatprep.subr.mxu0 0.0
      %1311 = vmatpush1.xpose.msra.mxu0 0.0
      %1312 = vmatprep.subr.mxu0 0.0
      %1313 = vmatpush1.xpose.msra.mxu0 0.0
      %1314 = vmatprep.subr.mxu0 0.0
      %1315 = vmatpush1.xpose.msra.mxu0 0.0
      %1316 = vmatprep.subr.mxu0 0.0
      %1317 = vmatpush1.xpose.msra.mxu0 0.0
      %1318 = vmatprep.subr.mxu0 0.0
      %1319 = vmatpush1.xpose.msra.mxu0 0.0
      %1320 = vmatprep.subr.mxu0 0.0
      %1321 = vmatpush1.xpose.msra.mxu0 0.0
      %1322 = vmatprep.subr.mxu0 0.0
      %1323 = vmatpush1.xpose.msra.mxu0 0.0
      %1324 = vmatprep.subr.mxu0 0.0
      %1325 = vmatpush1.xpose.msra.mxu0 0.0
      %1326 = vmatprep.subr.mxu0 0.0
      %1327 = vmatpush1.xpose.msra.mxu0 0.0
      %1328 = vmatprep.subr.mxu0 0.0
      %1329 = vmatpush1.xpose.msra.mxu0 0.0
      %1330 = vmatprep.subr.mxu0 0.0
      %1331 = vmatpush1.xpose.msra.mxu0 0.0
      %1332 = vmatprep.subr.mxu0 0.0
      %1333 = vmatpush1.xpose.msra.mxu0 0.0
      %1334 = vmatprep.subr.mxu0 0.0
      %1335 = vmatpush1.xpose.msra.mxu0 0.0
      %1336 = vmatprep.subr.mxu0 0.0
      %1337 = vmatpush1.xpose.msra.mxu0 0.0
      %1338 = vmatprep.subr.mxu0 0.0
      %1339 = vmatpush1.xpose.msra.mxu0 0.0
      %1340 = vmatprep.subr.mxu0 0.0
      %1341 = vmatpush1.xpose.msra.mxu0 0.0
      %1342 = vmatprep.subr.mxu0 0.0
      %1343 = vmatpush1.xpose.msra.mxu0 0.0
      %1344 = vmatprep.subr.mxu0 0.0
      %1345 = vmatpush1.xpose.msra.mxu0 0.0
      %1346 = vmatprep.mubr.f32.mxu0 0.0
      %1347 = vmatmul.mubr.f32.gmra.mrb[0].mxu0 %v1278
      %v1348 = vpop.f32.mrb[0].mxu0
      %v1349 = vadd.f32 0.0, %v1348
      %v1350 = vpop.f32.mrb[0].mxu0
      %1351 = vdwg.mxu0
      %v1352 = vmul.f32 %v1271, 0.25
      %v1353 = vmul.f32 %v1349, 0.25
      %v1354 = vadd.f32 %v1352, %v1012
      %v1355 = vadd.f32 %v1353, %v1016
      %v1356 = vsel %vm1021, %v1354, -inf
      %1357 = vmax.xlane.f32.xlu0 %v1356
      %v1358 = vpop.xlane.xlu0 %1357
      %v1359 = vsel %vm1021, %v1355, -inf
      %1360 = vmax.xlane.f32.xlu0 %v1359
      %v1361 = vpop.xlane.xlu0 %1360
      %v1362 = vsub.f32 %v1354, %v1358
      %v1363 = vsub.f32 %v1355, %v1361
      %v1364 = vmul.f32 %v1362, 1.442695
      %v1365 = vpow.pop %v1364
      %v1366 = vmul.f32 %v1363, 1.442695
      %v1367 = vpow.pop %v1366
      %v1368 = vsel %vm1021, %v1365, 0.0
      %1369 = vadd.xlane.f32.xlu0 %v1368
      %v1370 = vpop.xlane.xlu0 %1369
      %v1371 = vsel %vm1021, %v1367, 0.0
      %1372 = vadd.xlane.f32.xlu0 %v1371
      %v1373 = vpop.xlane.xlu0 %1372
      %v1374 = vrcp.pop %v1370
      %v1375 = vrcp.pop %v1373
      %v1376 = vmul.f32 %v1365, %v1374
      %v1377 = vmul.f32 %v1367, %v1375
      %1378 = vrot.lane.b32.xlu0 %v820, 48
      %v1379 = vpop.permute.xlu0 %1378
      %v1382 = vsel %vm1021, %v1376, 0
      %1384 = vmatprep.subr.mxu0 0.0
      %1385 = vmatpush1.msra.mxu0 %v1379
      %1386 = vmatprep.subr.mxu0 0.0
      %1387 = vmatpush1.msra.mxu0 0.0
      %1388 = vmatprep.subr.mxu0 0.0
      %1389 = vmatpush1.msra.mxu0 0.0
      %1390 = vmatprep.subr.mxu0 0.0
      %1391 = vmatpush1.msra.mxu0 0.0
      %1392 = vmatprep.subr.mxu0 0.0
      %1393 = vmatpush1.msra.mxu0 0.0
      %1394 = vmatprep.subr.mxu0 0.0
      %1395 = vmatpush1.msra.mxu0 0.0
      %1396 = vmatprep.subr.mxu0 0.0
      %1397 = vmatpush1.msra.mxu0 0.0
      %1398 = vmatprep.subr.mxu0 0.0
      %1399 = vmatpush1.msra.mxu0 0.0
      %1400 = vmatprep.subr.mxu0 0.0
      %1401 = vmatpush1.msra.mxu0 0.0
      %1402 = vmatprep.subr.mxu0 0.0
      %1403 = vmatpush1.msra.mxu0 0.0
      %1404 = vmatprep.subr.mxu0 0.0
      %1405 = vmatpush1.msra.mxu0 0.0
      %1406 = vmatprep.subr.mxu0 0.0
      %1407 = vmatpush1.msra.mxu0 0.0
      %1408 = vmatprep.subr.mxu0 0.0
      %1409 = vmatpush1.msra.mxu0 0.0
      %1410 = vmatprep.subr.mxu0 0.0
      %1411 = vmatpush1.msra.mxu0 0.0
      %1412 = vmatprep.subr.mxu0 0.0
      %1413 = vmatpush1.msra.mxu0 0.0
      %1414 = vmatprep.subr.mxu0 0.0
      %1415 = vmatpush1.msra.mxu0 0.0
      %1416 = vmatprep.subr.mxu0 0.0
      %1417 = vmatpush1.msra.mxu0 0.0
      %1418 = vmatprep.subr.mxu0 0.0
      %1419 = vmatpush1.msra.mxu0 0.0
      %1420 = vmatprep.subr.mxu0 0.0
      %1421 = vmatpush1.msra.mxu0 0.0
      %1422 = vmatprep.subr.mxu0 0.0
      %1423 = vmatpush1.msra.mxu0 0.0
      %1424 = vmatprep.subr.mxu0 0.0
      %1425 = vmatpush1.msra.mxu0 0.0
      %1426 = vmatprep.subr.mxu0 0.0
      %1427 = vmatpush1.msra.mxu0 0.0
      %1428 = vmatprep.subr.mxu0 0.0
      %1429 = vmatpush1.msra.mxu0 0.0
      %1430 = vmatprep.subr.mxu0 0.0
      %1431 = vmatpush1.msra.mxu0 0.0
      %1432 = vmatprep.subr.mxu0 0.0
      %1433 = vmatpush1.msra.mxu0 0.0
      %1434 = vmatprep.subr.mxu0 0.0
      %1435 = vmatpush1.msra.mxu0 0.0
      %1436 = vmatprep.subr.mxu0 0.0
      %1437 = vmatpush1.msra.mxu0 0.0
      %1438 = vmatprep.subr.mxu0 0.0
      %1439 = vmatpush1.msra.mxu0 0.0
      %1440 = vmatprep.subr.mxu0 0.0
      %1441 = vmatpush1.msra.mxu0 0.0
      %1442 = vmatprep.subr.mxu0 0.0
      %1443 = vmatpush1.msra.mxu0 0.0
      %1444 = vmatprep.subr.mxu0 0.0
      %1445 = vmatpush1.msra.mxu0 0.0
      %1446 = vmatprep.subr.mxu0 0.0
      %1447 = vmatpush1.msra.mxu0 0.0
      %1448 = vmatprep.mubr.f32.mxu0 0.0
      %1449 = vmatmul.mubr.f32.gmra.mrb[0].mxu0 %v1382
      %v1450 = vpop.f32.mrb[0].mxu0
      %v1451 = vadd.f32 0.0, %v1450
      %v1452 = vpop.f32.mrb[0].mxu0
      %1453 = vdwg.mxu0
      %1454 = vrot.lane.b32.xlu0 %v825, 48
      %v1455 = vpop.permute.xlu0 %1454
      %v1458 = vsel %vm1021, %v1377, 0
      %1460 = vmatprep.subr.mxu0 0.0
      %1461 = vmatpush1.msra.mxu0 %v1455
      %1462 = vmatprep.subr.mxu0 0.0
      %1463 = vmatpush1.msra.mxu0 0.0
      %1464 = vmatprep.subr.mxu0 0.0
      %1465 = vmatpush1.msra.mxu0 0.0
      %1466 = vmatprep.subr.mxu0 0.0
      %1467 = vmatpush1.msra.mxu0 0.0
      %1468 = vmatprep.subr.mxu0 0.0
      %1469 = vmatpush1.msra.mxu0 0.0
      %1470 = vmatprep.subr.mxu0 0.0
      %1471 = vmatpush1.msra.mxu0 0.0
      %1472 = vmatprep.subr.mxu0 0.0
      %1473 = vmatpush1.msra.mxu0 0.0
      %1474 = vmatprep.subr.mxu0 0.0
      %1475 = vmatpush1.msra.mxu0 0.0
      %1476 = vmatprep.subr.mxu0 0.0
      %1477 = vmatpush1.msra.mxu0 0.0
      %1478 = vmatprep.subr.mxu0 0.0
      %1479 = vmatpush1.msra.mxu0 0.0
      %1480 = vmatprep.subr.mxu0 0.0
      %1481 = vmatpush1.msra.mxu0 0.0
      %1482 = vmatprep.subr.mxu0 0.0
      %1483 = vmatpush1.msra.mxu0 0.0
      %1484 = vmatprep.subr.mxu0 0.0
      %1485 = vmatpush1.msra.mxu0 0.0
      %1486 = vmatprep.subr.mxu0 0.0
      %1487 = vmatpush1.msra.mxu0 0.0
      %1488 = vmatprep.subr.mxu0 0.0
      %1489 = vmatpush1.msra.mxu0 0.0
      %1490 = vmatprep.subr.mxu0 0.0
      %1491 = vmatpush1.msra.mxu0 0.0
      %1492 = vmatprep.subr.mxu0 0.0
      %1493 = vmatpush1.msra.mxu0 0.0
      %1494 = vmatprep.subr.mxu0 0.0
      %1495 = vmatpush1.msra.mxu0 0.0
      %1496 = vmatprep.subr.mxu0 0.0
      %1497 = vmatpush1.msra.mxu0 0.0
      %1498 = vmatprep.subr.mxu0 0.0
      %1499 = vmatpush1.msra.mxu0 0.0
      %1500 = vmatprep.subr.mxu0 0.0
      %1501 = vmatpush1.msra.mxu0 0.0
      %1502 = vmatprep.subr.mxu0 0.0
      %1503 = vmatpush1.msra.mxu0 0.0
      %1504 = vmatprep.subr.mxu0 0.0
      %1505 = vmatpush1.msra.mxu0 0.0
      %1506 = vmatprep.subr.mxu0 0.0
      %1507 = vmatpush1.msra.mxu0 0.0
      %1508 = vmatprep.subr.mxu0 0.0
      %1509 = vmatpush1.msra.mxu0 0.0
      %1510 = vmatprep.subr.mxu0 0.0
      %1511 = vmatpush1.msra.mxu0 0.0
      %1512 = vmatprep.subr.mxu0 0.0
      %1513 = vmatpush1.msra.mxu0 0.0
      %1514 = vmatprep.subr.mxu0 0.0
      %1515 = vmatpush1.msra.mxu0 0.0
      %1516 = vmatprep.subr.mxu0 0.0
      %1517 = vmatpush1.msra.mxu0 0.0
      %1518 = vmatprep.subr.mxu0 0.0
      %1519 = vmatpush1.msra.mxu0 0.0
      %1520 = vmatprep.subr.mxu0 0.0
      %1521 = vmatpush1.msra.mxu0 0.0
      %1522 = vmatprep.subr.mxu0 0.0
      %1523 = vmatpush1.msra.mxu0 0.0
      %1524 = vmatprep.mubr.f32.mxu0 0.0
      %1525 = vmatmul.mubr.f32.gmra.mrb[0].mxu0 %v1458
      %v1526 = vpop.f32.mrb[0].mxu0
      %v1527 = vadd.f32 0.0, %v1526
      %v1528 = vpop.f32.mrb[0].mxu0
      %1529 = vdwg.mxu0
      %1532 = vrot.lane.b32.xlu0 %v1451, 16
      %v1533 = vpop.permute.xlu0 %1532
      %1534 = vrot.lane.b32.xlu0 %v1527, 16
      %v1535 = vpop.permute.xlu0 %1534
      %v1538 = vsel %vm855, %v1117, %v1533
      %v1539 = vsel %vm855, %v1193, %v1535
      %v1540 = vld [vmem:[%s647] sm:$0xff]
      %v1541 = vld [vmem:[%s647 + $0x8] sm:$0xff]
      %v1542 = vld [vmem:[%s647 + $0x10] sm:$0xff]
      %v1543 = vld [vmem:[%s647 + $0x18] sm:$0xff]
      %v1544 = vld [vmem:[%s650] sm:$0x1]
      %v1546 = vlaneseq
      %v1547 = vshrl.u32 %v1546, 7
      %v1548 = vsub.s32 0, %v1547
      %v1549 = vrot.slane %v1544, %v1548
      %v1552 = vsel %vm746, %v1538, 0
      %v1555 = vsel %vm746, %v1539, 0
      %1557 = vmatprep.subr.mxu0 0.0
      %1558 = vmatpush1.msra.mxu0 %v1540
      %1559 = vmatprep.subr.mxu0 0.0
      %1560 = vmatpush1.msra.mxu0 %v1541
      %1561 = vmatprep.subr.mxu0 0.0
      %1562 = vmatpush1.msra.mxu0 %v1542
      %1563 = vmatprep.subr.mxu0 0.0
      %1564 = vmatpush1.msra.mxu0 %v1543
      %1565 = vmatprep.subr.mxu0 0.0
      %1566 = vmatpush1.msra.mxu0 0.0
      %1567 = vmatprep.subr.mxu0 0.0
      %1568 = vmatpush1.msra.mxu0 0.0
      %1569 = vmatprep.subr.mxu0 0.0
      %1570 = vmatpush1.msra.mxu0 0.0
      %1571 = vmatprep.subr.mxu0 0.0
      %1572 = vmatpush1.msra.mxu0 0.0
      %1573 = vmatprep.subr.mxu0 0.0
      %1574 = vmatpush1.msra.mxu0 0.0
      %1575 = vmatprep.subr.mxu0 0.0
      %1576 = vmatpush1.msra.mxu0 0.0
      %1577 = vmatprep.subr.mxu0 0.0
      %1578 = vmatpush1.msra.mxu0 0.0
      %1579 = vmatprep.subr.mxu0 0.0
      %1580 = vmatpush1.msra.mxu0 0.0
      %1581 = vmatprep.subr.mxu0 0.0
      %1582 = vmatpush1.msra.mxu0 0.0
      %1583 = vmatprep.subr.mxu0 0.0
      %1584 = vmatpush1.msra.mxu0 0.0
      %1585 = vmatprep.subr.mxu0 0.0
      %1586 = vmatpush1.msra.mxu0 0.0
      %1587 = vmatprep.subr.mxu0 0.0
      %1588 = vmatpush1.msra.mxu0 0.0
      %1589 = vmatprep.subr.mxu0 0.0
      %1590 = vmatpush1.msra.mxu0 0.0
      %1591 = vmatprep.subr.mxu0 0.0
      %1592 = vmatpush1.msra.mxu0 0.0
      %1593 = vmatprep.subr.mxu0 0.0
      %1594 = vmatpush1.msra.mxu0 0.0
      %1595 = vmatprep.subr.mxu0 0.0
      %1596 = vmatpush1.msra.mxu0 0.0
      %1597 = vmatprep.subr.mxu0 0.0
      %1598 = vmatpush1.msra.mxu0 0.0
      %1599 = vmatprep.subr.mxu0 0.0
      %1600 = vmatpush1.msra.mxu0 0.0
      %1601 = vmatprep.subr.mxu0 0.0
      %1602 = vmatpush1.msra.mxu0 0.0
      %1603 = vmatprep.subr.mxu0 0.0
      %1604 = vmatpush1.msra.mxu0 0.0
      %1605 = vmatprep.subr.mxu0 0.0
      %1606 = vmatpush1.msra.mxu0 0.0
      %1607 = vmatprep.subr.mxu0 0.0
      %1608 = vmatpush1.msra.mxu0 0.0
      %1609 = vmatprep.subr.mxu0 0.0
      %1610 = vmatpush1.msra.mxu0 0.0
      %1611 = vmatprep.subr.mxu0 0.0
      %1612 = vmatpush1.msra.mxu0 0.0
      %1613 = vmatprep.subr.mxu0 0.0
      %1614 = vmatpush1.msra.mxu0 0.0
      %1615 = vmatprep.subr.mxu0 0.0
      %1616 = vmatpush1.msra.mxu0 0.0
      %1617 = vmatprep.subr.mxu0 0.0
      %1618 = vmatpush1.msra.mxu0 0.0
      %1619 = vmatprep.subr.mxu0 0.0
      %1620 = vmatpush1.msra.mxu0 0.0
      %1621 = vmatprep.mubr.f32.mxu0 0.0
      %1622 = vmatmul.mubr.f32.gmra.mrb[0].mxu0 %v1552
      %v1623 = vpop.f32.mrb[0].mxu0
      %v1624 = vadd.f32 %v1549, %v1623
      %v1625 = vpop.f32.mrb[0].mxu0
      %1626 = vmatprep.mubr.f32.mxu0 0.0
      %1627 = vmatmul.mubr.f32.gmra.mrb[0].mxu0 %v1555
      %v1628 = vpop.f32.mrb[0].mxu0
      %v1629 = vadd.f32 %v1549, %v1628
      %v1630 = vpop.f32.mrb[0].mxu0
      %1631 = vdwg.mxu0
      %v1632 = vadd.f32 %v1624, %v733
      %v1633 = vadd.f32 %v1629, %v734
      %v1634 = vld [vmem:[%s653] sm:$0x1]
      %v1635 = vld [vmem:[%s656] sm:$0x1]
      %v1636 = vsel %vm746, %v1632, 0.0
      %1637 = vadd.xlane.f32.xlu0 %v1636
      %v1638 = vpop.xlane.xlu0 %1637
      %v1639 = vsel %vm746, %v1633, 0.0
      %1640 = vadd.xlane.f32.xlu0 %v1639
      %v1641 = vpop.xlane.xlu0 %1640
      %v1642 = vrcp.pop 32.0
      %v1643 = vmul.f32 %v1638, %v1642
      %v1644 = vmul.f32 %v1641, %v1642
      %v1645 = vsub.f32 %v1632, %v1643
      %v1646 = vsub.f32 %v1633, %v1644
      %v1647 = vmul.f32 %v1645, %v1645
      %v1648 = vmul.f32 %v1646, %v1646
      %v1649 = vsel %vm746, %v1647, 0.0
      %1650 = vadd.xlane.f32.xlu0 %v1649
      %v1651 = vpop.xlane.xlu0 %1650
      %v1652 = vsel %vm746, %v1648, 0.0
      %1653 = vadd.xlane.f32.xlu0 %v1652
      %v1654 = vpop.xlane.xlu0 %1653
      %v1655 = vmul.f32 %v1651, %v1642
      %v1656 = vmul.f32 %v1654, %v1642
      %v1657 = vadd.f32 %v1655, 1e-12
      %v1658 = vadd.f32 %v1656, 1e-12
      %v1659 = vrsqrt.pop %v1657
      %v1660 = vrsqrt.pop %v1658
      %v1661 = vmul.f32 %v1645, %v1659
      %v1662 = vmul.f32 %v1646, %v1660
      %v1664 = vlaneseq
      %v1665 = vshrl.u32 %v1664, 7
      %v1666 = vsub.s32 0, %v1665
      %v1667 = vrot.slane %v1634, %v1666
      %v1669 = vmul.f32 %v1661, %v1667
      %v1670 = vmul.f32 %v1662, %v1667
      %v1672 = vlaneseq
      %v1673 = vshrl.u32 %v1672, 7
      %v1674 = vsub.s32 0, %v1673
      %v1675 = vrot.slane %v1635, %v1674
      %v1677 = vadd.f32 %v1669, %v1675
      %v1678 = vadd.f32 %v1670, %v1675
      %v1679 = vld [vmem:[%s661] sm:$0xff]
      %v1680 = vld [vmem:[%s661 + $0x8] sm:$0xff]
      %v1681 = vld [vmem:[%s661 + $0x10] sm:$0xff]
      %v1682 = vld [vmem:[%s661 + $0x18] sm:$0xff]
      %v1683 = vld [vmem:[%s664] sm:$0x1]
      %v1685 = vlaneseq
      %v1686 = vshrl.u32 %v1685, 7
      %v1687 = vsub.s32 0, %v1686
      %v1688 = vrot.slane %v1683, %v1687
      %v1691 = vsel %vm746, %v1677, 0
      %v1694 = vsel %vm746, %v1678, 0
      %1696 = vmatprep.subr.mxu0 0.0
      %1697 = vmatpush1.msra.mxu0 %v1679
      %1698 = vmatprep.subr.mxu0 0.0
      %1699 = vmatpush1.msra.mxu0 %v1680
      %1700 = vmatprep.subr.mxu0 0.0
      %1701 = vmatpush1.msra.mxu0 %v1681
      %1702 = vmatprep.subr.mxu0 0.0
      %1703 = vmatpush1.msra.mxu0 %v1682
      %1704 = vmatprep.subr.mxu0 0.0
      %1705 = vmatpush1.msra.mxu0 0.0
      %1706 = vmatprep.subr.mxu0 0.0
      %1707 = vmatpush1.msra.mxu0 0.0
      %1708 = vmatprep.subr.mxu0 0.0
      %1709 = vmatpush1.msra.mxu0 0.0
      %1710 = vmatprep.subr.mxu0 0.0
      %1711 = vmatpush1.msra.mxu0 0.0
      %1712 = vmatprep.subr.mxu0 0.0
      %1713 = vmatpush1.msra.mxu0 0.0
      %1714 = vmatprep.subr.mxu0 0.0
      %1715 = vmatpush1.msra.mxu0 0.0
      %1716 = vmatprep.subr.mxu0 0.0
      %1717 = vmatpush1.msra.mxu0 0.0
      %1718 = vmatprep.subr.mxu0 0.0
      %1719 = vmatpush1.msra.mxu0 0.0
      %1720 = vmatprep.subr.mxu0 0.0
      %1721 = vmatpush1.msra.mxu0 0.0
      %1722 = vmatprep.subr.mxu0 0.0
      %1723 = vmatpush1.msra.mxu0 0.0
      %1724 = vmatprep.subr.mxu0 0.0
      %1725 = vmatpush1.msra.mxu0 0.0
      %1726 = vmatprep.subr.mxu0 0.0
      %1727 = vmatpush1.msra.mxu0 0.0
      %1728 = vmatprep.subr.mxu0 0.0
      %1729 = vmatpush1.msra.mxu0 0.0
      %1730 = vmatprep.subr.mxu0 0.0
      %1731 = vmatpush1.msra.mxu0 0.0
      %1732 = vmatprep.subr.mxu0 0.0
      %1733 = vmatpush1.msra.mxu0 0.0
      %1734 = vmatprep.subr.mxu0 0.0
      %1735 = vmatpush1.msra.mxu0 0.0
      %1736 = vmatprep.subr.mxu0 0.0
      %1737 = vmatpush1.msra.mxu0 0.0
      %1738 = vmatprep.subr.mxu0 0.0
      %1739 = vmatpush1.msra.mxu0 0.0
      %1740 = vmatprep.subr.mxu0 0.0
      %1741 = vmatpush1.msra.mxu0 0.0
      %1742 = vmatprep.subr.mxu0 0.0
      %1743 = vmatpush1.msra.mxu0 0.0
      %1744 = vmatprep.subr.mxu0 0.0
      %1745 = vmatpush1.msra.mxu0 0.0
      %1746 = vmatprep.subr.mxu0 0.0
      %1747 = vmatpush1.msra.mxu0 0.0
      %1748 = vmatprep.subr.mxu0 0.0
      %1749 = vmatpush1.msra.mxu0 0.0
      %1750 = vmatprep.subr.mxu0 0.0
      %1751 = vmatpush1.msra.mxu0 0.0
      %1752 = vmatprep.subr.mxu0 0.0
      %1753 = vmatpush1.msra.mxu0 0.0
      %1754 = vmatprep.subr.mxu0 0.0
      %1755 = vmatpush1.msra.mxu0 0.0
      %1756 = vmatprep.subr.mxu0 0.0
      %1757 = vmatpush1.msra.mxu0 0.0
      %1758 = vmatprep.subr.mxu0 0.0
      %1759 = vmatpush1.msra.mxu0 0.0
      %1760 = vmatprep.mubr.f32.mxu0 0.0
      %1761 = vmatmul.mubr.f32.gmra.mrb[0].mxu0 %v1691
      %v1762 = vpop.f32.mrb[0].mxu0
      %v1763 = vadd.f32 %v1688, %v1762
      %v1764 = vpop.f32.mrb[0].mxu0
      %1765 = vmatprep.mubr.f32.mxu0 0.0
      %1766 = vmatmul.mubr.f32.gmra.mrb[0].mxu0 %v1694
      %v1767 = vpop.f32.mrb[0].mxu0
      %v1768 = vadd.f32 %v1688, %v1767
      %v1769 = vpop.f32.mrb[0].mxu0
      %1770 = vdwg.mxu0
      %v1771 = vmul.f32 %v1763, 0.5
      %v1772 = vmul.f32 %v1768, 0.5
      %v1773 = vmul.f32 %v1763, 0.044715
      %v1774 = vmul.f32 %v1768, 0.044715
      %v1775 = vmul.f32 %v1773, %v1763
      %v1776 = vmul.f32 %v1774, %v1768
      %v1777 = vmul.f32 %v1775, %v1763
      %v1778 = vmul.f32 %v1776, %v1768
      %v1779 = vadd.f32 %v1763, %v1777
      %v1780 = vadd.f32 %v1768, %v1778
      %v1781 = vmul.f32 %v1779, 0.7978846
      %v1782 = vmul.f32 %v1780, 0.7978846
      %v1783 = vtanh.pop %v1781
      %v1784 = vtanh.pop %v1782
      %v1785 = vadd.f32 %v1783, 1.0
      %v1786 = vadd.f32 %v1784, 1.0
      %v1787 = vmul.f32 %v1771, %v1785
      %v1788 = vmul.f32 %v1772, %v1786
      %v1789 = vld [vmem:[%s669] sm:$0xff]
      %v1790 = vld [vmem:[%s669 + $0x8] sm:$0xff]
      %v1791 = vld [vmem:[%s669 + $0x10] sm:$0xff]
      %v1792 = vld [vmem:[%s669 + $0x18] sm:$0xff]
      %v1793 = vld [vmem:[%s669 + $0x20] sm:$0xff]
      %v1794 = vld [vmem:[%s669 + $0x28] sm:$0xff]
      %v1795 = vld [vmem:[%s669 + $0x30] sm:$0xff]
      %v1796 = vld [vmem:[%s669 + $0x38] sm:$0xff]
      %v1797 = vld [vmem:[%s672] sm:$0x1]
      %v1799 = vlaneseq
      %v1800 = vshrl.u32 %v1799, 7
      %v1801 = vsub.s32 0, %v1800
      %v1802 = vrot.slane %v1797, %v1801
      %vm1804 = vcmask 523264
      %v1806 = vsel %vm1804, %v1787, 0
      %v1809 = vsel %vm1804, %v1788, 0
      %1811 = vmatprep.subr.mxu0 0.0
      %1812 = vmatpush1.msra.mxu0 %v1789
      %1813 = vmatprep.subr.mxu0 0.0
      %1814 = vmatpush1.msra.mxu0 %v1790
      %1815 = vmatprep.subr.mxu0 0.0
      %1816 = vmatpush1.msra.mxu0 %v1791
      %1817 = vmatprep.subr.mxu0 0.0
      %1818 = vmatpush1.msra.mxu0 %v1792
      %1819 = vmatprep.subr.mxu0 0.0
      %1820 = vmatpush1.msra.mxu0 %v1793
      %1821 = vmatprep.subr.mxu0 0.0
      %1822 = vmatpush1.msra.mxu0 %v1794
      %1823 = vmatprep.subr.mxu0 0.0
      %1824 = vmatpush1.msra.mxu0 %v1795
      %1825 = vmatprep.subr.mxu0 0.0
      %1826 = vmatpush1.msra.mxu0 %v1796
      %1827 = vmatprep.subr.mxu0 0.0
      %1828 = vmatpush1.msra.mxu0 0.0
      %1829 = vmatprep.subr.mxu0 0.0
      %1830 = vmatpush1.msra.mxu0 0.0
      %1831 = vmatprep.subr.mxu0 0.0
      %1832 = vmatpush1.msra.mxu0 0.0
      %1833 = vmatprep.subr.mxu0 0.0
      %1834 = vmatpush1.msra.mxu0 0.0
      %1835 = vmatprep.subr.mxu0 0.0
      %1836 = vmatpush1.msra.mxu0 0.0
      %1837 = vmatprep.subr.mxu0 0.0
      %1838 = vmatpush1.msra.mxu0 0.0
      %1839 = vmatprep.subr.mxu0 0.0
      %1840 = vmatpush1.msra.mxu0 0.0
      %1841 = vmatprep.subr.mxu0 0.0
      %1842 = vmatpush1.msra.mxu0 0.0
      %1843 = vmatprep.subr.mxu0 0.0
      %1844 = vmatpush1.msra.mxu0 0.0
      %1845 = vmatprep.subr.mxu0 0.0
      %1846 = vmatpush1.msra.mxu0 0.0
      %1847 = vmatprep.subr.mxu0 0.0
      %1848 = vmatpush1.msra.mxu0 0.0
      %1849 = vmatprep.subr.mxu0 0.0
      %1850 = vmatpush1.msra.mxu0 0.0
      %1851 = vmatprep.subr.mxu0 0.0
      %1852 = vmatpush1.msra.mxu0 0.0
      %1853 = vmatprep.subr.mxu0 0.0
      %1854 = vmatpush1.msra.mxu0 0.0
      %1855 = vmatprep.subr.mxu0 0.0
      %1856 = vmatpush1.msra.mxu0 0.0
      %1857 = vmatprep.subr.mxu0 0.0
      %1858 = vmatpush1.msra.mxu0 0.0
      %1859 = vmatprep.subr.mxu0 0.0
      %1860 = vmatpush1.msra.mxu0 0.0
      %1861 = vmatprep.subr.mxu0 0.0
      %1862 = vmatpush1.msra.mxu0 0.0
      %1863 = vmatprep.subr.mxu0 0.0
      %1864 = vmatpush1.msra.mxu0 0.0
      %1865 = vmatprep.subr.mxu0 0.0
      %1866 = vmatpush1.msra.mxu0 0.0
      %1867 = vmatprep.subr.mxu0 0.0
      %1868 = vmatpush1.msra.mxu0 0.0
      %1869 = vmatprep.subr.mxu0 0.0
      %1870 = vmatpush1.msra.mxu0 0.0
      %1871 = vmatprep.subr.mxu0 0.0
      %1872 = vmatpush1.msra.mxu0 0.0
      %1873 = vmatprep.subr.mxu0 0.0
      %1874 = vmatpush1.msra.mxu0 0.0
      %1875 = vmatprep.mubr.f32.mxu0 0.0
      %1876 = vmatmul.mubr.f32.gmra.mrb[0].mxu0 %v1806
      %v1877 = vpop.f32.mrb[0].mxu0
      %v1878 = vadd.f32 %v1802, %v1877
      %v1879 = vpop.f32.mrb[0].mxu0
      %1880 = vmatprep.mubr.f32.mxu0 0.0
      %1881 = vmatmul.mubr.f32.gmra.mrb[0].mxu0 %v1809
      %v1882 = vpop.f32.mrb[0].mxu0
      %v1883 = vadd.f32 %v1802, %v1882
      %v1884 = vpop.f32.mrb[0].mxu0
      %1885 = vdwg.mxu0
      %v1886 = vadd.f32 %v1878, %v1677
      %v1887 = vadd.f32 %v1883, %v1678
      %v1888 = vld [vmem:[%s675] sm:$0x1]
      %v1889 = vld [vmem:[%s678] sm:$0x1]
      %v1890 = vsel %vm746, %v1886, 0.0
      %1891 = vadd.xlane.f32.xlu0 %v1890
      %v1892 = vpop.xlane.xlu0 %1891
      %v1893 = vsel %vm746, %v1887, 0.0
      %1894 = vadd.xlane.f32.xlu0 %v1893
      %v1895 = vpop.xlane.xlu0 %1894
      %v1896 = vmul.f32 %v1892, %v1642
      %v1897 = vmul.f32 %v1895, %v1642
      %v1898 = vsub.f32 %v1886, %v1896
      %v1899 = vsub.f32 %v1887, %v1897
      %v1900 = vmul.f32 %v1898, %v1898
      %v1901 = vmul.f32 %v1899, %v1899
      %v1902 = vsel %vm746, %v1900, 0.0
      %1903 = vadd.xlane.f32.xlu0 %v1902
      %v1904 = vpop.xlane.xlu0 %1903
      %v1905 = vsel %vm746, %v1901, 0.0
      %1906 = vadd.xlane.f32.xlu0 %v1905
      %v1907 = vpop.xlane.xlu0 %1906
      %v1908 = vmul.f32 %v1904, %v1642
      %v1909 = vmul.f32 %v1907, %v1642
      %v1910 = vadd.f32 %v1908, 1e-12
      %v1911 = vadd.f32 %v1909, 1e-12
      %v1912 = vrsqrt.pop %v1910
      %v1913 = vrsqrt.pop %v1911
      %v1914 = vmul.f32 %v1898, %v1912
      %v1915 = vmul.f32 %v1899, %v1913
      %v1917 = vlaneseq
      %v1918 = vshrl.u32 %v1917, 7
      %v1919 = vsub.s32 0, %v1918
      %v1920 = vrot.slane %v1888, %v1919
      %v1922 = vmul.f32 %v1914, %v1920
      %v1923 = vmul.f32 %v1915, %v1920
      %v1925 = vlaneseq
      %v1926 = vshrl.u32 %v1925, 7
      %v1927 = vsub.s32 0, %v1926
      %v1928 = vrot.slane %v1889, %v1927
      %v1930 = vadd.f32 %v1922, %v1928
      %v1931 = vadd.f32 %v1923, %v1928
      %1932 = vst.msk [vmem:[%s16] sm:$0xff] %vm746, %v1930
      %1933 = vst.msk [vmem:[%s16 + $0x8] sm:$0xff] %vm746, %v1931
      // Predicated region
      $region89: #{_lambda_.2} parent=83 // pred_check
        %p1934 = pneg %p436
      $region90: #{_lambda_.2} parent=83 // pred_check_branch
        %1936 = sbr.rel (%p1934) target = $region92
      $region91: #{_lambda_.2} parent=83 // pred_region
        _
      $region92: #{_lambda_.2} parent=83 // pred_fallthru
        _
      // Predicated region
      $region93: #{_lambda_.2} parent=83 // pred_check
        %p1937 = pneg %p436
      $region94: #{_lambda_.2} parent=83 // pred_check_branch
        %1939 = sbr.rel (%p1937) target = $region96
      $region95: #{_lambda_.2} parent=83 // pred_region
        _
      $region96: #{_lambda_.2} parent=83 // pred_fallthru
        _
    $region84: #{_lambda_.2} parent=5 // pred_fallthru
      _
    %p1940 = scmp.le.s32.totalorder 2, %s22
    // Predicated region
    $region97: #{_lambda_.2} parent=5 // pred_check
      %p1941 = pneg %p1940
    $region98: #{_lambda_.2} parent=5 // pred_check_branch
      %1943 = sbr.rel (%p1941) target = $region100
    $region99: #{_lambda_.2} parent=5 // pred_region
      %s1944 = ssub.s32 %s22, 2
    $region100: #{_lambda_.2} parent=5 // pred_fallthru
      _
  $region6: #{_lambda_.2} parent=0 // loop_footer
    %s26 = sadd.s32 1, %s22
  $region7: #{_lambda_.2} parent=0 // loop_footer_branch
    %21 = sbr.rel target = $region3
  $region8: #{_lambda_.2} parent=0 // loop_exit
    _

</llo_original>
